<compile_context>
chip_gen: v7x
topology: tpu7x:2x2x1
jax: 0.10.0
libtpu: 0.0.40
codegen_flags: <defaults>
</compile_context>

<pallas_src>
import numpy as np
import jax
import jax.numpy as jnp
from jax.experimental import pallas as pl
from jax.experimental.pallas import tpu as pltpu


# ---------------------------------------------------------------------------
# Fused kernel: conv1 -> ReLU -> conv2 -> ReLU -> fc1 -> ReLU -> fc2,
# expressed as four chained MXU matmuls on bf16 operands with f32 accumulate.
# Single grid point; everything resident in VMEM.
# ---------------------------------------------------------------------------
def _conv2d_head_kernel(x_ref, m1_ref, m2_ref, wf1_ref, wf2_ref, b_ref, out_ref):
    f32 = jnp.float32
    bf16 = jnp.bfloat16
    n1 = m1_ref.shape[1]
    n2 = m2_ref.shape[1]
    n3 = wf1_ref.shape[1]
    n4 = wf2_ref.shape[1]

    xb = x_ref[...].astype(bf16)                                    # [B, C*H*W]
    # conv1 (Toeplitz matmul) + bias + ReLU   -> [B, n1]
    h1 = jnp.dot(xb, m1_ref[...], preferred_element_type=f32)
    h1 = jnp.maximum(h1 + b_ref[0:1, 0:n1], 0.0)
    # conv2 + bias + ReLU                     -> [B, n2]
    h2 = jnp.dot(h1.astype(bf16), m2_ref[...], preferred_element_type=f32)
    h2 = jnp.maximum(h2 + b_ref[1:2, 0:n2], 0.0)
    # fc1 + bias + ReLU                       -> [B, n3]
    h3 = jnp.dot(h2.astype(bf16), wf1_ref[...], preferred_element_type=f32)
    h3 = jnp.maximum(h3 + b_ref[2:3, 0:n3], 0.0)
    # fc2 + bias                              -> [B, n4] (lane-padded)
    h4 = jnp.dot(h3.astype(bf16), wf2_ref[...], preferred_element_type=f32)
    h4 = h4 + b_ref[3:4, 0:n4]
    out_ref[...] = h4[:, 0:out_ref.shape[1]]                        # [B, out]


# ---------------------------------------------------------------------------
# Host-side (numpy) construction of the exact dense "unrolled convolution"
# matrix for a torch.nn.Conv2d (zero padding, stride), with NCHW channel-major
# flattening on input and output.  Column dim padded to `cols_pad`.
# ---------------------------------------------------------------------------
def _conv_as_matmul_np(w, in_chw, stride, padding, rows_pad, cols_pad):
    cout, cin, kh, kw = w.shape
    c, h, wd = in_chw
    assert c == cin
    oh = (h + 2 * padding - kh) // stride + 1
    ow = (wd + 2 * padding - kw) // stride + 1
    m = np.zeros((rows_pad, cols_pad), np.float32)
    nnz = 0
    for co in range(cout):
        for ci in range(cin):
            for ky in range(kh):
                for kx in range(kw):
                    val = w[co, ci, ky, kx]
                    for oy in range(oh):
                        iy = oy * stride + ky - padding
                        if iy < 0 or iy >= h:
                            continue
                        for ox in range(ow):
                            ix = ox * stride + kx - padding
                            if ix < 0 or ix >= wd:
                                continue
                            # += is safe accumulation semantics.
                            m[ci * h * wd + iy * wd + ix,
                              co * oh * ow + oy * ow + ox] += val
                            nnz += 1
    return m, (oh, ow), nnz


def _ceil128(n):
    return max(128, ((n + 127) // 128) * 128)


# ---------------------------------------------------------------------------
# Builder: does ALL weight-matrix / bias construction once (host numpy) and
# returns a jitted forward(x) whose per-call work is reshape + pallas_call.
# ---------------------------------------------------------------------------
def make_conv2d_head_forward(params, *, image_shape, strides, paddings):
    c, h, w = image_shape
    w1 = np.asarray(params["conv1_w"], np.float32)
    b1 = np.asarray(params["conv1_b"], np.float32)
    w2 = np.asarray(params["conv2_w"], np.float32)
    b2 = np.asarray(params["conv2_b"], np.float32)
    wf1 = np.asarray(params["fc1_w"], np.float32)   # [conv_out, hidden]
    bf1 = np.asarray(params["fc1_b"], np.float32)
    wf2 = np.asarray(params["fc2_w"], np.float32)   # [hidden, out]
    bf2 = np.asarray(params["fc2_b"], np.float32)

    k0 = c * h * w
    c1 = w1.shape[0]
    c2 = w2.shape[0]
    hidden = wf1.shape[1]
    out_size = wf2.shape[1]

    # conv1 as matmul, columns padded lane-dense.
    oh1 = (h + 2 * paddings[0] - w1.shape[2]) // strides[0] + 1
    ow1 = (w + 2 * paddings[0] - w1.shape[3]) // strides[0] + 1
    n1 = c1 * oh1 * ow1
    p1 = _ceil128(n1)
    m1, _, nnz1 = _conv_as_matmul_np(w1, (c, h, w), strides[0], paddings[0],
                                     rows_pad=k0, cols_pad=p1)
    # conv2 as matmul: input rows padded to p1 (extra rows are zero).
    oh2 = (oh1 + 2 * paddings[1] - w2.shape[2]) // strides[1] + 1
    ow2 = (ow1 + 2 * paddings[1] - w2.shape[3]) // strides[1] + 1
    n2 = c2 * oh2 * ow2
    p2 = _ceil128(n2)
    m2, _, nnz2 = _conv_as_matmul_np(w2, (c1, oh1, ow1), strides[1], paddings[1],
                                     rows_pad=p1, cols_pad=p2)
    # fc weights, zero-padded to lane-dense shapes.
    p3 = _ceil128(hidden)
    p4 = _ceil128(out_size)
    wf1_pad = np.zeros((p2, p3), np.float32)
    wf1_pad[:n2, :hidden] = wf1
    wf2_pad = np.zeros((p3, p4), np.float32)
    wf2_pad[:hidden, :out_size] = wf2

    # One packed bias slab (f32), sliced in-kernel: row0 conv1, row1 conv2,
    # row2 fc1, row3 fc2.  Channel-major flattened conv biases.
    pmax = max(p1, p2, p3, p4)
    bias = np.zeros((4, pmax), np.float32)
    bias[0, :n1] = np.repeat(b1, oh1 * ow1)
    bias[1, :n2] = np.repeat(b2, oh2 * ow2)
    bias[2, :hidden] = bf1
    bias[3, :out_size] = bf2

    # Device-resident constants (built once).
    m1_d = jnp.asarray(m1, jnp.bfloat16)
    m2_d = jnp.asarray(m2, jnp.bfloat16)
    wf1_d = jnp.asarray(wf1_pad, jnp.bfloat16)
    wf2_d = jnp.asarray(wf2_pad, jnp.bfloat16)
    bias_d = jnp.asarray(bias, jnp.float32)

    # Honest (sparse) FLOP count: only the real conv taps + the fc matmuls.
    flops_per_sample = 2 * (nnz1 + nnz2 + wf1.size + wf2.size)
    param_bytes = 2 * (m1.size + m2.size + wf1_pad.size + wf2_pad.size) + 4 * bias.size

    vmem = pl.BlockSpec(memory_space=pltpu.MemorySpace.VMEM)

    @jax.jit
    def forward(x):
        B = x.shape[0]
        x_flat = x.reshape(B, k0)
        cost = pl.CostEstimate(
            flops=B * flops_per_sample,
            transcendentals=0,
            bytes_accessed=4 * B * k0 + param_bytes + 4 * B * out_size,
        )
        return pl.pallas_call(
            _conv2d_head_kernel,
            out_shape=jax.ShapeDtypeStruct((B, out_size), jnp.float32),
            in_specs=[vmem] * 6,
            out_specs=vmem,
            cost_estimate=cost,
        )(x_flat, m1_d, m2_d, wf1_d, wf2_d, bias_d)

    return forward


# ---------------------------------------------------------------------------
# Pure-JAX reference (direct patch-wise convolution, PyTorch semantics).
# bf16_operands=True models the kernel's exact arithmetic: bf16 operands for
# every matmul, f32 accumulation, f32 bias/ReLU.
# ---------------------------------------------------------------------------
def _conv2d_nchw_ref(x, w, b, stride, padding):
    if padding:
        x = jnp.pad(x, ((0, 0), (0, 0), (padding, padding), (padding, padding)))
    B, cin, h, wd = x.shape
    cout, _, kh, kw = w.shape
    oh = (h - kh) // stride + 1
    ow = (wd - kw) // stride + 1
    outs = []
    for oy in range(oh):
        for ox in range(ow):
            patch = x[:, :, oy * stride:oy * stride + kh,
                         ox * stride:ox * stride + kw]
            outs.append(jnp.einsum("bchw,ochw->bo", patch, w,
                                   precision=jax.lax.Precision.HIGHEST) + b)
    return jnp.stack(outs, axis=-1).reshape(B, cout, oh, ow)


def _reference(x, params, strides, paddings, bf16_operands=False):
    if bf16_operands:
        q = lambda a: a.astype(jnp.bfloat16).astype(jnp.float32)
    else:
        q = lambda a: a
    h = jnp.maximum(_conv2d_nchw_ref(q(x), q(params["conv1_w"]), params["conv1_b"],
                                     strides[0], paddings[0]), 0.0)
    h = jnp.maximum(_conv2d_nchw_ref(q(h), q(params["conv2_w"]), params["conv2_b"],
                                     strides[1], paddings[1]), 0.0)
    flat = h.reshape(h.shape[0], -1)                    # torch .view(B, -1) on NCHW
    hid = jnp.maximum(jnp.dot(q(flat), q(params["fc1_w"]),
                              precision=jax.lax.Precision.HIGHEST)
                      + params["fc1_b"], 0.0)
    return (jnp.dot(q(hid), q(params["fc2_w"]),
                    precision=jax.lax.Precision.HIGHEST) + params["fc2_b"])


if __name__ == "__main__":
    # Conv2dHeadModel(image_shape=(4,16,16), channels=[8,16], kernel_sizes=[3,3],
    #                 strides=[2,2], hidden_sizes=[32], output_size=16,
    #                 paddings=[0,0], use_maxpool=False)
    B = 2
    image_shape = (4, 16, 16)      # (c, h, w)
    channels = [8, 16]
    kernel_sizes = [3, 3]
    strides = [2, 2]
    paddings = [0, 0]
    hidden_sizes = [32]
    output_size = 16

    c, h, w = image_shape
    oh1 = (h + 2 * paddings[0] - kernel_sizes[0]) // strides[0] + 1
    ow1 = (w + 2 * paddings[0] - kernel_sizes[0]) // strides[0] + 1
    oh2 = (oh1 + 2 * paddings[1] - kernel_sizes[1]) // strides[1] + 1
    ow2 = (ow1 + 2 * paddings[1] - kernel_sizes[1]) // strides[1] + 1
    conv_out_size = channels[1] * oh2 * ow2              # == 16*3*3 = 144

    key = jax.random.PRNGKey(0)
    ks = jax.random.split(key, 9)
    x = jax.random.normal(ks[0], (B, c, h, w), dtype=jnp.float32)
    params = {
        "conv1_w": 0.1 * jax.random.normal(
            ks[1], (channels[0], c, kernel_sizes[0], kernel_sizes[0]), jnp.float32),
        "conv1_b": 0.1 * jax.random.normal(ks[2], (channels[0],), jnp.float32),
        "conv2_w": 0.1 * jax.random.normal(
            ks[3], (channels[1], channels[0], kernel_sizes[1], kernel_sizes[1]),
            jnp.float32),
        "conv2_b": 0.1 * jax.random.normal(ks[4], (channels[1],), jnp.float32),
        # Linear weights stored pre-transposed to [in, out] (row-vector matmul).
        "fc1_w": 0.1 * jax.random.normal(ks[5], (conv_out_size, hidden_sizes[0]),
                                         jnp.float32),
        "fc1_b": 0.1 * jax.random.normal(ks[6], (hidden_sizes[0],), jnp.float32),
        "fc2_w": 0.1 * jax.random.normal(ks[7], (hidden_sizes[0], output_size),
                                         jnp.float32),
        "fc2_b": 0.1 * jax.random.normal(ks[8], (output_size,), jnp.float32),
    }

    # One-time construction of all kernel constants (hoisted out of per-call path).
    forward = make_conv2d_head_forward(
        params, image_shape=image_shape, strides=strides, paddings=paddings)

    out = jax.block_until_ready(forward(x))
    assert out.shape == (B, output_size)

    # Tight check vs. a reference with identical arithmetic (bf16 operands,
    # f32 accumulation) -- validates the fused kernel math exactly.
    ref_q = _reference(x, params, strides, paddings, bf16_operands=True)
    assert jnp.allclose(out, ref_q, rtol=1e-3, atol=1e-3), "mismatch vs bf16-operand reference"

    # Loose check vs. the pure-f32 PyTorch-semantics reference; tolerance is
    # intentionally widened to cover the deliberate bf16 operand quantization.
    ref_f32 = _reference(x, params, strides, paddings, bf16_operands=False)
    assert jnp.allclose(out, ref_f32, rtol=1e-1, atol=1e-1), "mismatch vs f32 reference"

    print("KERNEL_OK")
</pallas_src>

<mosaic_0001>
module attributes {stable_mosaic.version = 11 : i64} {
  func.func @_conv2d_head_kernel(%arg0: memref<2x1024xf32, #tpu.memory_space<vmem>>, %arg1: memref<1024x512xbf16, #tpu.memory_space<vmem>>, %arg2: memref<512x256xbf16, #tpu.memory_space<vmem>>, %arg3: memref<256x128xbf16, #tpu.memory_space<vmem>>, %arg4: memref<128x128xbf16, #tpu.memory_space<vmem>>, %arg5: memref<4x512xf32, #tpu.memory_space<vmem>>, %arg6: memref<2x16xf32, #tpu.memory_space<vmem>>) attributes {dimension_semantics = [], scalar_prefetch = 0 : i64, scratch_operands = 0 : i64, tpu.core_type = #tpu.core_type<tc>} {
    %c0 = arith.constant 0 : index
    %c0_0 = arith.constant 0 : index
    %0 = vector.load %arg0[%c0, %c0_0] : memref<2x1024xf32, #tpu.memory_space<vmem>>, vector<2x1024xf32>
    %1 = arith.truncf %0 : vector<2x1024xf32> to vector<2x1024xbf16>
    %c0_1 = arith.constant 0 : index
    %c0_2 = arith.constant 0 : index
    %2 = vector.load %arg1[%c0_1, %c0_2] : memref<1024x512xbf16, #tpu.memory_space<vmem>>, vector<1024x512xbf16>
    %cst = arith.constant dense<0.000000e+00> : vector<2x512xf32>
    %3 = tpu.matmul %1, %2, %cst {dimension_numbers = #tpu.dot_dimension_numbers<[1], [0], [0], [1], [0, 0, 1, 1], [], []>} : vector<2x1024xbf16>, vector<1024x512xbf16>, vector<2x512xf32> -> vector<2x512xf32>
    %c0_3 = arith.constant 0 : index
    %c0_4 = arith.constant 0 : index
    %4 = vector.load %arg5[%c0_3, %c0_4] : memref<4x512xf32, #tpu.memory_space<vmem>>, vector<1x512xf32>
    %5 = vector.broadcast %4 : vector<1x512xf32> to vector<2x512xf32>
    %6 = arith.addf %3, %5 : vector<2x512xf32>
    %cst_5 = arith.constant 0.000000e+00 : f32
    %7 = vector.broadcast %cst_5 : f32 to vector<2x512xf32>
    %8 = arith.maximumf %6, %7 : vector<2x512xf32>
    %9 = arith.truncf %8 : vector<2x512xf32> to vector<2x512xbf16>
    %c0_6 = arith.constant 0 : index
    %c0_7 = arith.constant 0 : index
    %10 = vector.load %arg2[%c0_6, %c0_7] : memref<512x256xbf16, #tpu.memory_space<vmem>>, vector<512x256xbf16>
    %cst_8 = arith.constant dense<0.000000e+00> : vector<2x256xf32>
    %11 = tpu.matmul %9, %10, %cst_8 {dimension_numbers = #tpu.dot_dimension_numbers<[1], [0], [0], [1], [0, 0, 1, 1], [], []>} : vector<2x512xbf16>, vector<512x256xbf16>, vector<2x256xf32> -> vector<2x256xf32>
    %c1 = arith.constant 1 : index
    %c0_9 = arith.constant 0 : index
    %12 = vector.load %arg5[%c1, %c0_9] : memref<4x512xf32, #tpu.memory_space<vmem>>, vector<1x256xf32>
    %13 = vector.broadcast %12 : vector<1x256xf32> to vector<2x256xf32>
    %14 = arith.addf %11, %13 : vector<2x256xf32>
    %cst_10 = arith.constant 0.000000e+00 : f32
    %15 = vector.broadcast %cst_10 : f32 to vector<2x256xf32>
    %16 = arith.maximumf %14, %15 : vector<2x256xf32>
    %17 = arith.truncf %16 : vector<2x256xf32> to vector<2x256xbf16>
    %c0_11 = arith.constant 0 : index
    %c0_12 = arith.constant 0 : index
    %18 = vector.load %arg3[%c0_11, %c0_12] : memref<256x128xbf16, #tpu.memory_space<vmem>>, vector<256x128xbf16>
    %cst_13 = arith.constant dense<0.000000e+00> : vector<2x128xf32>
    %19 = tpu.matmul %17, %18, %cst_13 {dimension_numbers = #tpu.dot_dimension_numbers<[1], [0], [0], [1], [0, 0, 1, 1], [], []>} : vector<2x256xbf16>, vector<256x128xbf16>, vector<2x128xf32> -> vector<2x128xf32>
    %c2 = arith.constant 2 : index
    %c0_14 = arith.constant 0 : index
    %20 = vector.load %arg5[%c2, %c0_14] : memref<4x512xf32, #tpu.memory_space<vmem>>, vector<1x128xf32>
    %21 = vector.broadcast %20 : vector<1x128xf32> to vector<2x128xf32>
    %22 = arith.addf %19, %21 : vector<2x128xf32>
    %cst_15 = arith.constant 0.000000e+00 : f32
    %23 = vector.broadcast %cst_15 : f32 to vector<2x128xf32>
    %24 = arith.maximumf %22, %23 : vector<2x128xf32>
    %25 = arith.truncf %24 : vector<2x128xf32> to vector<2x128xbf16>
    %c0_16 = arith.constant 0 : index
    %c0_17 = arith.constant 0 : index
    %26 = vector.load %arg4[%c0_16, %c0_17] : memref<128x128xbf16, #tpu.memory_space<vmem>>, vector<128x128xbf16>
    %cst_18 = arith.constant dense<0.000000e+00> : vector<2x128xf32>
    %27 = tpu.matmul %25, %26, %cst_18 {dimension_numbers = #tpu.dot_dimension_numbers<[1], [0], [0], [1], [0, 0, 1, 1], [], []>} : vector<2x128xbf16>, vector<128x128xbf16>, vector<2x128xf32> -> vector<2x128xf32>
    %c3 = arith.constant 3 : index
    %c0_19 = arith.constant 0 : index
    %28 = vector.load %arg5[%c3, %c0_19] : memref<4x512xf32, #tpu.memory_space<vmem>>, vector<1x128xf32>
    %29 = vector.broadcast %28 : vector<1x128xf32> to vector<2x128xf32>
    %30 = arith.addf %27, %29 : vector<2x128xf32>
    %31 = vector.extract_strided_slice %30 {offsets = [0, 0], sizes = [2, 16], strides = [1, 1]} : vector<2x128xf32> to vector<2x16xf32>
    %c0_20 = arith.constant 0 : index
    %c0_21 = arith.constant 0 : index
    %32 = vector.load %arg6[%c0_20, %c0_21] : memref<2x16xf32, #tpu.memory_space<vmem>>, vector<2x16xf32>
    tpu.vector_store %arg6[%c0_20, %c0_21], %31 {strides = array<i32>} : memref<2x16xf32, #tpu.memory_space<vmem>>, vector<2x16xf32>,
    return
  }
}

</mosaic_0001>

<llo_original>
// kernel: forward.1
$region0: #{forward.1}
  #allocation0 [shape = 'u32[]', space=smem, size = 0x4, offset = 0x4, fixed_abs, tag = 'smem constant byte address 0x4 - core index']
  #allocation1 [shape = 'u32[144,128]{1,0:T(1,128)}', space=vmem, size = 0x12000, scoped, tag = 'internal scratch']
  %s0 = inlined_call_operand.vmem [shape: f32[2,1024], index: 0, kind: input, shape index: {}]
  %s1 = inlined_call_operand.vmem [shape: bf16[1024,512], index: 1, kind: input, shape index: {}]
  %s2 = inlined_call_operand.vmem [shape: bf16[512,256], index: 2, kind: input, shape index: {}]
  %s3 = inlined_call_operand.vmem [shape: bf16[256,128], index: 3, kind: input, shape index: {}]
  %s4 = inlined_call_operand.vmem [shape: bf16[128,128], index: 4, kind: input, shape index: {}]
  %s5 = inlined_call_operand.vmem [shape: f32[4,512], index: 5, kind: input, shape index: {}]
  %s6 = inlined_call_operand.hbm [shape: f32[2,16], index: 6, kind: output, shape index: {}]
  %s7 = sld [smem:[#allocation0]]
  $region34: #{forward.1} parent=0
    _
  %s9 = ssub.s32 1, %s7
  %s10 = scalar_select 0, %s9, %s7
  $region1: #{forward.1} parent=0
    #allocation2 [shape = 'u8[1024]{0}', space=vmem, size = 0x400, scoped, tag = 'output window, operand 0, single buffered']
    #allocation3 [shape = 's32[1]{0}', space=sflag, size = 0x4, scoped, tag = 'scoped memory for forward.1']
    %11 = vsyncpa [#allocation3], 0
    // Predicated region
    $region2: #{forward.1} parent=1 // pred_check
      _
    $region3: #{forward.1} parent=1 // pred_check_branch
      %13 = sbr.rel (0) target = $region5
    $region4: #{forward.1} parent=1 // pred_region
      _
    $region5: #{forward.1} parent=1 // pred_fallthru
      _
    // Predicated region
    $region6: #{forward.1} parent=1 // pred_check
      _
    $region7: #{forward.1} parent=1 // pred_check_branch
      %15 = sbr.rel (0) target = $region9
    $region8: #{forward.1} parent=1 // pred_region
      _
    $region9: #{forward.1} parent=1 // pred_fallthru
      _
    // Predicated region
    $region10: #{forward.1} parent=1 // pred_check
      _
    $region11: #{forward.1} parent=1 // pred_check_branch
      %17 = sbr.rel (0) target = $region13
    $region12: #{forward.1} parent=1 // pred_region
      _
    $region13: #{forward.1} parent=1 // pred_fallthru
      _
    // Predicated region
    $region14: #{forward.1} parent=1 // pred_check
      _
    $region15: #{forward.1} parent=1 // pred_check_branch
      %19 = sbr.rel (0) target = $region17
    $region16: #{forward.1} parent=1 // pred_region
      _
    $region17: #{forward.1} parent=1 // pred_fallthru
      _
    // Predicated region
    $region18: #{forward.1} parent=1 // pred_check
      _
    $region19: #{forward.1} parent=1 // pred_check_branch
      %21 = sbr.rel (0) target = $region21
    $region20: #{forward.1} parent=1 // pred_region
      _
    $region21: #{forward.1} parent=1 // pred_fallthru
      _
    // Predicated region
    $region22: #{forward.1} parent=1 // pred_check
      _
    $region23: #{forward.1} parent=1 // pred_check_branch
      %23 = sbr.rel (0) target = $region25
    $region24: #{forward.1} parent=1 // pred_region
      _
    $region25: #{forward.1} parent=1 // pred_fallthru
      _
    %v25 = vld [vmem:[%s0] sm:$0xff]
    %v26 = vld [vmem:[%s0 + $0x8] sm:$0xff]
    %v29 = vcombine.high %v25, %v25
    %v31 = vunpack.c.l.s4 1983009808
    %v32 = vunpack.c.0.s8 %v31
    %v33 = vlaneseq
    %v34 = vshrl.u32 %v33, 7
    %v35 = vsub.s32 %v32, %v34
    %v36 = vrot.slane %v25, %v35
    %v38 = vunpack.c.l.s4 1983009808
    %v39 = vunpack.c.0.s8 %v38
    %v40 = vlaneseq
    %v41 = vshrl.u32 %v40, 7
    %v42 = vsub.s32 %v39, %v41
    %v43 = vrot.slane %v29, %v42
    %v44 = vcombine.high %v36, %v36
    %v45 = vcombine.high %v43, %v43
    %v46 = vcombine.high %v26, %v26
    %v48 = vunpack.c.l.s4 1983009808
    %v49 = vunpack.c.0.s8 %v48
    %v50 = vlaneseq
    %v51 = vshrl.u32 %v50, 7
    %v52 = vsub.s32 %v49, %v51
    %v53 = vrot.slane %v26, %v52
    %v55 = vunpack.c.l.s4 1983009808
    %v56 = vunpack.c.0.s8 %v55
    %v57 = vlaneseq
    %v58 = vshrl.u32 %v57, 7
    %v59 = vsub.s32 %v56, %v58
    %v60 = vrot.slane %v46, %v59
    %v61 = vcombine.high %v53, %v53
    %v62 = vcombine.high %v60, %v60
    %v71 = vpack.c.bf16 %v36, %v36
    %v72 = vpack.c.bf16 %v44, %v44
    %v73 = vpack.c.bf16 %v43, %v43
    %v74 = vpack.c.bf16 %v45, %v45
    %v75 = vpack.c.bf16 %v53, %v53
    %v76 = vpack.c.bf16 %v61, %v61
    %v77 = vpack.c.bf16 %v60, %v60
    %v78 = vpack.c.bf16 %v62, %v62
    %v79 = vld [vmem:[%s1] sm:$0xff]
    %v80 = vld [vmem:[%s1 + $0x8] sm:$0xff]
    %v81 = vld [vmem:[%s1 + $0x10] sm:$0xff]
    %v82 = vld [vmem:[%s1 + $0x18] sm:$0xff]
    %v83 = vld [vmem:[%s1 + $0x20] sm:$0xff]
    %v84 = vld [vmem:[%s1 + $0x28] sm:$0xff]
    %v85 = vld [vmem:[%s1 + $0x30] sm:$0xff]
    %v86 = vld [vmem:[%s1 + $0x38] sm:$0xff]
    %v87 = vld [vmem:[%s1 + $0x40] sm:$0xff]
    %v88 = vld [vmem:[%s1 + $0x48] sm:$0xff]
    %v89 = vld [vmem:[%s1 + $0x50] sm:$0xff]
    %v90 = vld [vmem:[%s1 + $0x58] sm:$0xff]
    %v91 = vld [vmem:[%s1 + $0x60] sm:$0xff]
    %v92 = vld [vmem:[%s1 + $0x68] sm:$0xff]
    %v93 = vld [vmem:[%s1 + $0x70] sm:$0xff]
    %v94 = vld [vmem:[%s1 + $0x78] sm:$0xff]
    %v95 = vld [vmem:[%s1 + $0x80] sm:$0xff]
    %v96 = vld [vmem:[%s1 + $0x88] sm:$0xff]
    %v97 = vld [vmem:[%s1 + $0x90] sm:$0xff]
    %v98 = vld [vmem:[%s1 + $0x98] sm:$0xff]
    %v99 = vld [vmem:[%s1 + $0xa0] sm:$0xff]
    %v100 = vld [vmem:[%s1 + $0xa8] sm:$0xff]
    %v101 = vld [vmem:[%s1 + $0xb0] sm:$0xff]
    %v102 = vld [vmem:[%s1 + $0xb8] sm:$0xff]
    %v103 = vld [vmem:[%s1 + $0xc0] sm:$0xff]
    %v104 = vld [vmem:[%s1 + $0xc8] sm:$0xff]
    %v105 = vld [vmem:[%s1 + $0xd0] sm:$0xff]
    %v106 = vld [vmem:[%s1 + $0xd8] sm:$0xff]
    %v107 = vld [vmem:[%s1 + $0xe0] sm:$0xff]
    %v108 = vld [vmem:[%s1 + $0xe8] sm:$0xff]
    %v109 = vld [vmem:[%s1 + $0xf0] sm:$0xff]
    %v110 = vld [vmem:[%s1 + $0xf8] sm:$0xff]
    %v111 = vld [vmem:[%s1 + $0x100] sm:$0xff]
    %v112 = vld [vmem:[%s1 + $0x108] sm:$0xff]
    %v113 = vld [vmem:[%s1 + $0x110] sm:$0xff]
    %v114 = vld [vmem:[%s1 + $0x118] sm:$0xff]
    %v115 = vld [vmem:[%s1 + $0x120] sm:$0xff]
    %v116 = vld [vmem:[%s1 + $0x128] sm:$0xff]
    %v117 = vld [vmem:[%s1 + $0x130] sm:$0xff]
    %v118 = vld [vmem:[%s1 + $0x138] sm:$0xff]
    %v119 = vld [vmem:[%s1 + $0x140] sm:$0xff]
    %v120 = vld [vmem:[%s1 + $0x148] sm:$0xff]
    %v121 = vld [vmem:[%s1 + $0x150] sm:$0xff]
    %v122 = vld [vmem:[%s1 + $0x158] sm:$0xff]
    %v123 = vld [vmem:[%s1 + $0x160] sm:$0xff]
    %v124 = vld [vmem:[%s1 + $0x168] sm:$0xff]
    %v125 = vld [vmem:[%s1 + $0x170] sm:$0xff]
    %v126 = vld [vmem:[%s1 + $0x178] sm:$0xff]
    %v127 = vld [vmem:[%s1 + $0x180] sm:$0xff]
    %v128 = vld [vmem:[%s1 + $0x188] sm:$0xff]
    %v129 = vld [vmem:[%s1 + $0x190] sm:$0xff]
    %v130 = vld [vmem:[%s1 + $0x198] sm:$0xff]
    %v131 = vld [vmem:[%s1 + $0x1a0] sm:$0xff]
    %v132 = vld [vmem:[%s1 + $0x1a8] sm:$0xff]
    %v133 = vld [vmem:[%s1 + $0x1b0] sm:$0xff]
    %v134 = vld [vmem:[%s1 + $0x1b8] sm:$0xff]
    %v135 = vld [vmem:[%s1 + $0x1c0] sm:$0xff]
    %v136 = vld [vmem:[%s1 + $0x1c8] sm:$0xff]
    %v137 = vld [vmem:[%s1 + $0x1d0] sm:$0xff]
    %v138 = vld [vmem:[%s1 + $0x1d8] sm:$0xff]
    %v139 = vld [vmem:[%s1 + $0x1e0] sm:$0xff]
    %v140 = vld [vmem:[%s1 + $0x1e8] sm:$0xff]
    %v141 = vld [vmem:[%s1 + $0x1f0] sm:$0xff]
    %v142 = vld [vmem:[%s1 + $0x1f8] sm:$0xff]
    %v143 = vld [vmem:[%s1 + $0x200] sm:$0xff]
    %v144 = vld [vmem:[%s1 + $0x208] sm:$0xff]
    %v145 = vld [vmem:[%s1 + $0x210] sm:$0xff]
    %v146 = vld [vmem:[%s1 + $0x218] sm:$0xff]
    %v147 = vld [vmem:[%s1 + $0x220] sm:$0xff]
    %v148 = vld [vmem:[%s1 + $0x228] sm:$0xff]
    %v149 = vld [vmem:[%s1 + $0x230] sm:$0xff]
    %v150 = vld [vmem:[%s1 + $0x238] sm:$0xff]
    %v151 = vld [vmem:[%s1 + $0x240] sm:$0xff]
    %v152 = vld [vmem:[%s1 + $0x248] sm:$0xff]
    %v153 = vld [vmem:[%s1 + $0x250] sm:$0xff]
    %v154 = vld [vmem:[%s1 + $0x258] sm:$0xff]
    %v155 = vld [vmem:[%s1 + $0x260] sm:$0xff]
    %v156 = vld [vmem:[%s1 + $0x268] sm:$0xff]
    %v157 = vld [vmem:[%s1 + $0x270] sm:$0xff]
    %v158 = vld [vmem:[%s1 + $0x278] sm:$0xff]
    %v159 = vld [vmem:[%s1 + $0x280] sm:$0xff]
    %v160 = vld [vmem:[%s1 + $0x288] sm:$0xff]
    %v161 = vld [vmem:[%s1 + $0x290] sm:$0xff]
    %v162 = vld [vmem:[%s1 + $0x298] sm:$0xff]
    %v163 = vld [vmem:[%s1 + $0x2a0] sm:$0xff]
    %v164 = vld [vmem:[%s1 + $0x2a8] sm:$0xff]
    %v165 = vld [vmem:[%s1 + $0x2b0] sm:$0xff]
    %v166 = vld [vmem:[%s1 + $0x2b8] sm:$0xff]
    %v167 = vld [vmem:[%s1 + $0x2c0] sm:$0xff]
    %v168 = vld [vmem:[%s1 + $0x2c8] sm:$0xff]
    %v169 = vld [vmem:[%s1 + $0x2d0] sm:$0xff]
    %v170 = vld [vmem:[%s1 + $0x2d8] sm:$0xff]
    %v171 = vld [vmem:[%s1 + $0x2e0] sm:$0xff]
    %v172 = vld [vmem:[%s1 + $0x2e8] sm:$0xff]
    %v173 = vld [vmem:[%s1 + $0x2f0] sm:$0xff]
    %v174 = vld [vmem:[%s1 + $0x2f8] sm:$0xff]
    %v175 = vld [vmem:[%s1 + $0x300] sm:$0xff]
    %v176 = vld [vmem:[%s1 + $0x308] sm:$0xff]
    %v177 = vld [vmem:[%s1 + $0x310] sm:$0xff]
    %v178 = vld [vmem:[%s1 + $0x318] sm:$0xff]
    %v179 = vld [vmem:[%s1 + $0x320] sm:$0xff]
    %v180 = vld [vmem:[%s1 + $0x328] sm:$0xff]
    %v181 = vld [vmem:[%s1 + $0x330] sm:$0xff]
    %v182 = vld [vmem:[%s1 + $0x338] sm:$0xff]
    %v183 = vld [vmem:[%s1 + $0x340] sm:$0xff]
    %v184 = vld [vmem:[%s1 + $0x348] sm:$0xff]
    %v185 = vld [vmem:[%s1 + $0x350] sm:$0xff]
    %v186 = vld [vmem:[%s1 + $0x358] sm:$0xff]
    %v187 = vld [vmem:[%s1 + $0x360] sm:$0xff]
    %v188 = vld [vmem:[%s1 + $0x368] sm:$0xff]
    %v189 = vld [vmem:[%s1 + $0x370] sm:$0xff]
    %v190 = vld [vmem:[%s1 + $0x378] sm:$0xff]
    %v191 = vld [vmem:[%s1 + $0x380] sm:$0xff]
    %v192 = vld [vmem:[%s1 + $0x388] sm:$0xff]
    %v193 = vld [vmem:[%s1 + $0x390] sm:$0xff]
    %v194 = vld [vmem:[%s1 + $0x398] sm:$0xff]
    %v195 = vld [vmem:[%s1 + $0x3a0] sm:$0xff]
    %v196 = vld [vmem:[%s1 + $0x3a8] sm:$0xff]
    %v197 = vld [vmem:[%s1 + $0x3b0] sm:$0xff]
    %v198 = vld [vmem:[%s1 + $0x3b8] sm:$0xff]
    %v199 = vld [vmem:[%s1 + $0x3c0] sm:$0xff]
    %v200 = vld [vmem:[%s1 + $0x3c8] sm:$0xff]
    %v201 = vld [vmem:[%s1 + $0x3d0] sm:$0xff]
    %v202 = vld [vmem:[%s1 + $0x3d8] sm:$0xff]
    %v203 = vld [vmem:[%s1 + $0x3e0] sm:$0xff]
    %v204 = vld [vmem:[%s1 + $0x3e8] sm:$0xff]
    %v205 = vld [vmem:[%s1 + $0x3f0] sm:$0xff]
    %v206 = vld [vmem:[%s1 + $0x3f8] sm:$0xff]
    %v207 = vld [vmem:[%s1 + $0x400] sm:$0xff]
    %v208 = vld [vmem:[%s1 + $0x408] sm:$0xff]
    %v209 = vld [vmem:[%s1 + $0x410] sm:$0xff]
    %v210 = vld [vmem:[%s1 + $0x418] sm:$0xff]
    %v211 = vld [vmem:[%s1 + $0x420] sm:$0xff]
    %v212 = vld [vmem:[%s1 + $0x428] sm:$0xff]
    %v213 = vld [vmem:[%s1 + $0x430] sm:$0xff]
    %v214 = vld [vmem:[%s1 + $0x438] sm:$0xff]
    %v215 = vld [vmem:[%s1 + $0x440] sm:$0xff]
    %v216 = vld [vmem:[%s1 + $0x448] sm:$0xff]
    %v217 = vld [vmem:[%s1 + $0x450] sm:$0xff]
    %v218 = vld [vmem:[%s1 + $0x458] sm:$0xff]
    %v219 = vld [vmem:[%s1 + $0x460] sm:$0xff]
    %v220 = vld [vmem:[%s1 + $0x468] sm:$0xff]
    %v221 = vld [vmem:[%s1 + $0x470] sm:$0xff]
    %v222 = vld [vmem:[%s1 + $0x478] sm:$0xff]
    %v223 = vld [vmem:[%s1 + $0x480] sm:$0xff]
    %v224 = vld [vmem:[%s1 + $0x488] sm:$0xff]
    %v225 = vld [vmem:[%s1 + $0x490] sm:$0xff]
    %v226 = vld [vmem:[%s1 + $0x498] sm:$0xff]
    %v227 = vld [vmem:[%s1 + $0x4a0] sm:$0xff]
    %v228 = vld [vmem:[%s1 + $0x4a8] sm:$0xff]
    %v229 = vld [vmem:[%s1 + $0x4b0] sm:$0xff]
    %v230 = vld [vmem:[%s1 + $0x4b8] sm:$0xff]
    %v231 = vld [vmem:[%s1 + $0x4c0] sm:$0xff]
    %v232 = vld [vmem:[%s1 + $0x4c8] sm:$0xff]
    %v233 = vld [vmem:[%s1 + $0x4d0] sm:$0xff]
    %v234 = vld [vmem:[%s1 + $0x4d8] sm:$0xff]
    %v235 = vld [vmem:[%s1 + $0x4e0] sm:$0xff]
    %v236 = vld [vmem:[%s1 + $0x4e8] sm:$0xff]
    %v237 = vld [vmem:[%s1 + $0x4f0] sm:$0xff]
    %v238 = vld [vmem:[%s1 + $0x4f8] sm:$0xff]
    %v239 = vld [vmem:[%s1 + $0x500] sm:$0xff]
    %v240 = vld [vmem:[%s1 + $0x508] sm:$0xff]
    %v241 = vld [vmem:[%s1 + $0x510] sm:$0xff]
    %v242 = vld [vmem:[%s1 + $0x518] sm:$0xff]
    %v243 = vld [vmem:[%s1 + $0x520] sm:$0xff]
    %v244 = vld [vmem:[%s1 + $0x528] sm:$0xff]
    %v245 = vld [vmem:[%s1 + $0x530] sm:$0xff]
    %v246 = vld [vmem:[%s1 + $0x538] sm:$0xff]
    %v247 = vld [vmem:[%s1 + $0x540] sm:$0xff]
    %v248 = vld [vmem:[%s1 + $0x548] sm:$0xff]
    %v249 = vld [vmem:[%s1 + $0x550] sm:$0xff]
    %v250 = vld [vmem:[%s1 + $0x558] sm:$0xff]
    %v251 = vld [vmem:[%s1 + $0x560] sm:$0xff]
    %v252 = vld [vmem:[%s1 + $0x568] sm:$0xff]
    %v253 = vld [vmem:[%s1 + $0x570] sm:$0xff]
    %v254 = vld [vmem:[%s1 + $0x578] sm:$0xff]
    %v255 = vld [vmem:[%s1 + $0x580] sm:$0xff]
    %v256 = vld [vmem:[%s1 + $0x588] sm:$0xff]
    %v257 = vld [vmem:[%s1 + $0x590] sm:$0xff]
    %v258 = vld [vmem:[%s1 + $0x598] sm:$0xff]
    %v259 = vld [vmem:[%s1 + $0x5a0] sm:$0xff]
    %v260 = vld [vmem:[%s1 + $0x5a8] sm:$0xff]
    %v261 = vld [vmem:[%s1 + $0x5b0] sm:$0xff]
    %v262 = vld [vmem:[%s1 + $0x5b8] sm:$0xff]
    %v263 = vld [vmem:[%s1 + $0x5c0] sm:$0xff]
    %v264 = vld [vmem:[%s1 + $0x5c8] sm:$0xff]
    %v265 = vld [vmem:[%s1 + $0x5d0] sm:$0xff]
    %v266 = vld [vmem:[%s1 + $0x5d8] sm:$0xff]
    %v267 = vld [vmem:[%s1 + $0x5e0] sm:$0xff]
    %v268 = vld [vmem:[%s1 + $0x5e8] sm:$0xff]
    %v269 = vld [vmem:[%s1 + $0x5f0] sm:$0xff]
    %v270 = vld [vmem:[%s1 + $0x5f8] sm:$0xff]
    %v271 = vld [vmem:[%s1 + $0x600] sm:$0xff]
    %v272 = vld [vmem:[%s1 + $0x608] sm:$0xff]
    %v273 = vld [vmem:[%s1 + $0x610] sm:$0xff]
    %v274 = vld [vmem:[%s1 + $0x618] sm:$0xff]
    %v275 = vld [vmem:[%s1 + $0x620] sm:$0xff]
    %v276 = vld [vmem:[%s1 + $0x628] sm:$0xff]
    %v277 = vld [vmem:[%s1 + $0x630] sm:$0xff]
    %v278 = vld [vmem:[%s1 + $0x638] sm:$0xff]
    %v279 = vld [vmem:[%s1 + $0x640] sm:$0xff]
    %v280 = vld [vmem:[%s1 + $0x648] sm:$0xff]
    %v281 = vld [vmem:[%s1 + $0x650] sm:$0xff]
    %v282 = vld [vmem:[%s1 + $0x658] sm:$0xff]
    %v283 = vld [vmem:[%s1 + $0x660] sm:$0xff]
    %v284 = vld [vmem:[%s1 + $0x668] sm:$0xff]
    %v285 = vld [vmem:[%s1 + $0x670] sm:$0xff]
    %v286 = vld [vmem:[%s1 + $0x678] sm:$0xff]
    %v287 = vld [vmem:[%s1 + $0x680] sm:$0xff]
    %v288 = vld [vmem:[%s1 + $0x688] sm:$0xff]
    %v289 = vld [vmem:[%s1 + $0x690] sm:$0xff]
    %v290 = vld [vmem:[%s1 + $0x698] sm:$0xff]
    %v291 = vld [vmem:[%s1 + $0x6a0] sm:$0xff]
    %v292 = vld [vmem:[%s1 + $0x6a8] sm:$0xff]
    %v293 = vld [vmem:[%s1 + $0x6b0] sm:$0xff]
    %v294 = vld [vmem:[%s1 + $0x6b8] sm:$0xff]
    %v295 = vld [vmem:[%s1 + $0x6c0] sm:$0xff]
    %v296 = vld [vmem:[%s1 + $0x6c8] sm:$0xff]
    %v297 = vld [vmem:[%s1 + $0x6d0] sm:$0xff]
    %v298 = vld [vmem:[%s1 + $0x6d8] sm:$0xff]
    %v299 = vld [vmem:[%s1 + $0x6e0] sm:$0xff]
    %v300 = vld [vmem:[%s1 + $0x6e8] sm:$0xff]
    %v301 = vld [vmem:[%s1 + $0x6f0] sm:$0xff]
    %v302 = vld [vmem:[%s1 + $0x6f8] sm:$0xff]
    %v303 = vld [vmem:[%s1 + $0x700] sm:$0xff]
    %v304 = vld [vmem:[%s1 + $0x708] sm:$0xff]
    %v305 = vld [vmem:[%s1 + $0x710] sm:$0xff]
    %v306 = vld [vmem:[%s1 + $0x718] sm:$0xff]
    %v307 = vld [vmem:[%s1 + $0x720] sm:$0xff]
    %v308 = vld [vmem:[%s1 + $0x728] sm:$0xff]
    %v309 = vld [vmem:[%s1 + $0x730] sm:$0xff]
    %v310 = vld [vmem:[%s1 + $0x738] sm:$0xff]
    %v311 = vld [vmem:[%s1 + $0x740] sm:$0xff]
    %v312 = vld [vmem:[%s1 + $0x748] sm:$0xff]
    %v313 = vld [vmem:[%s1 + $0x750] sm:$0xff]
    %v314 = vld [vmem:[%s1 + $0x758] sm:$0xff]
    %v315 = vld [vmem:[%s1 + $0x760] sm:$0xff]
    %v316 = vld [vmem:[%s1 + $0x768] sm:$0xff]
    %v317 = vld [vmem:[%s1 + $0x770] sm:$0xff]
    %v318 = vld [vmem:[%s1 + $0x778] sm:$0xff]
    %v319 = vld [vmem:[%s1 + $0x780] sm:$0xff]
    %v320 = vld [vmem:[%s1 + $0x788] sm:$0xff]
    %v321 = vld [vmem:[%s1 + $0x790] sm:$0xff]
    %v322 = vld [vmem:[%s1 + $0x798] sm:$0xff]
    %v323 = vld [vmem:[%s1 + $0x7a0] sm:$0xff]
    %v324 = vld [vmem:[%s1 + $0x7a8] sm:$0xff]
    %v325 = vld [vmem:[%s1 + $0x7b0] sm:$0xff]
    %v326 = vld [vmem:[%s1 + $0x7b8] sm:$0xff]
    %v327 = vld [vmem:[%s1 + $0x7c0] sm:$0xff]
    %v328 = vld [vmem:[%s1 + $0x7c8] sm:$0xff]
    %v329 = vld [vmem:[%s1 + $0x7d0] sm:$0xff]
    %v330 = vld [vmem:[%s1 + $0x7d8] sm:$0xff]
    %v331 = vld [vmem:[%s1 + $0x7e0] sm:$0xff]
    %v332 = vld [vmem:[%s1 + $0x7e8] sm:$0xff]
    %v333 = vld [vmem:[%s1 + $0x7f0] sm:$0xff]
    %v334 = vld [vmem:[%s1 + $0x7f8] sm:$0xff]
    %v335 = vld [vmem:[%s5] ss:$4 sm:$0xf]
    %v337 = vlaneseq
    %v338 = vshrl.u32 %v337, 7
    %v339 = vsub.s32 0, %v338
    %v340 = vrot.slane %v335, %v339
    %v341 = vlaneseq
    %v342 = vshrl.u32 %v341, 7
    %v343 = vsub.s32 1, %v342
    %v344 = vrot.slane %v335, %v343
    %v345 = vlaneseq
    %v346 = vshrl.u32 %v345, 7
    %v347 = vsub.s32 2, %v346
    %v348 = vrot.slane %v335, %v347
    %v349 = vlaneseq
    %v350 = vshrl.u32 %v349, 7
    %v351 = vsub.s32 3, %v350
    %v352 = vrot.slane %v335, %v351
    %v613 = vunpack.c.l.b16 %v79
    %v614 = vunpack.c.h.b16 %v79
    %v615 = vunpack.c.l.b16 %v80
    %v616 = vunpack.c.h.b16 %v80
    %v617 = vunpack.c.l.b16 %v81
    %v618 = vunpack.c.h.b16 %v81
    %v619 = vunpack.c.l.b16 %v82
    %v620 = vunpack.c.h.b16 %v82
    %v621 = vunpack.c.l.b16 %v83
    %v622 = vunpack.c.h.b16 %v83
    %v623 = vunpack.c.l.b16 %v84
    %v624 = vunpack.c.h.b16 %v84
    %v625 = vunpack.c.l.b16 %v85
    %v626 = vunpack.c.h.b16 %v85
    %v627 = vunpack.c.l.b16 %v86
    %v628 = vunpack.c.h.b16 %v86
    %v629 = vunpack.c.l.b16 %v87
    %v630 = vunpack.c.h.b16 %v87
    %v631 = vunpack.c.l.b16 %v88
    %v632 = vunpack.c.h.b16 %v88
    %v633 = vunpack.c.l.b16 %v89
    %v634 = vunpack.c.h.b16 %v89
    %v635 = vunpack.c.l.b16 %v90
    %v636 = vunpack.c.h.b16 %v90
    %v637 = vunpack.c.l.b16 %v91
    %v638 = vunpack.c.h.b16 %v91
    %v639 = vunpack.c.l.b16 %v92
    %v640 = vunpack.c.h.b16 %v92
    %v641 = vunpack.c.l.b16 %v93
    %v642 = vunpack.c.h.b16 %v93
    %v643 = vunpack.c.l.b16 %v94
    %v644 = vunpack.c.h.b16 %v94
    %v645 = vunpack.c.l.b16 %v95
    %v646 = vunpack.c.h.b16 %v95
    %v647 = vunpack.c.l.b16 %v96
    %v648 = vunpack.c.h.b16 %v96
    %v649 = vunpack.c.l.b16 %v97
    %v650 = vunpack.c.h.b16 %v97
    %v651 = vunpack.c.l.b16 %v98
    %v652 = vunpack.c.h.b16 %v98
    %v653 = vunpack.c.l.b16 %v99
    %v654 = vunpack.c.h.b16 %v99
    %v655 = vunpack.c.l.b16 %v100
    %v656 = vunpack.c.h.b16 %v100
    %v657 = vunpack.c.l.b16 %v101
    %v658 = vunpack.c.h.b16 %v101
    %v659 = vunpack.c.l.b16 %v102
    %v660 = vunpack.c.h.b16 %v102
    %v661 = vunpack.c.l.b16 %v103
    %v662 = vunpack.c.h.b16 %v103
    %v663 = vunpack.c.l.b16 %v104
    %v664 = vunpack.c.h.b16 %v104
    %v665 = vunpack.c.l.b16 %v105
    %v666 = vunpack.c.h.b16 %v105
    %v667 = vunpack.c.l.b16 %v106
    %v668 = vunpack.c.h.b16 %v106
    %v669 = vunpack.c.l.b16 %v107
    %v670 = vunpack.c.h.b16 %v107
    %v671 = vunpack.c.l.b16 %v108
    %v672 = vunpack.c.h.b16 %v108
    %v673 = vunpack.c.l.b16 %v109
    %v674 = vunpack.c.h.b16 %v109
    %v675 = vunpack.c.l.b16 %v110
    %v676 = vunpack.c.h.b16 %v110
    %v677 = vunpack.c.l.b16 %v111
    %v678 = vunpack.c.h.b16 %v111
    %v679 = vunpack.c.l.b16 %v112
    %v680 = vunpack.c.h.b16 %v112
    %v681 = vunpack.c.l.b16 %v113
    %v682 = vunpack.c.h.b16 %v113
    %v683 = vunpack.c.l.b16 %v114
    %v684 = vunpack.c.h.b16 %v114
    %v685 = vunpack.c.l.b16 %v115
    %v686 = vunpack.c.h.b16 %v115
    %v687 = vunpack.c.l.b16 %v116
    %v688 = vunpack.c.h.b16 %v116
    %v689 = vunpack.c.l.b16 %v117
    %v690 = vunpack.c.h.b16 %v117
    %v691 = vunpack.c.l.b16 %v118
    %v692 = vunpack.c.h.b16 %v118
    %v693 = vunpack.c.l.b16 %v119
    %v694 = vunpack.c.h.b16 %v119
    %v695 = vunpack.c.l.b16 %v120
    %v696 = vunpack.c.h.b16 %v120
    %v697 = vunpack.c.l.b16 %v121
    %v698 = vunpack.c.h.b16 %v121
    %v699 = vunpack.c.l.b16 %v122
    %v700 = vunpack.c.h.b16 %v122
    %v701 = vunpack.c.l.b16 %v123
    %v702 = vunpack.c.h.b16 %v123
    %v703 = vunpack.c.l.b16 %v124
    %v704 = vunpack.c.h.b16 %v124
    %v705 = vunpack.c.l.b16 %v125
    %v706 = vunpack.c.h.b16 %v125
    %v707 = vunpack.c.l.b16 %v126
    %v708 = vunpack.c.h.b16 %v126
    %v709 = vunpack.c.l.b16 %v127
    %v710 = vunpack.c.h.b16 %v127
    %v711 = vunpack.c.l.b16 %v128
    %v712 = vunpack.c.h.b16 %v128
    %v713 = vunpack.c.l.b16 %v129
    %v714 = vunpack.c.h.b16 %v129
    %v715 = vunpack.c.l.b16 %v130
    %v716 = vunpack.c.h.b16 %v130
    %v717 = vunpack.c.l.b16 %v131
    %v718 = vunpack.c.h.b16 %v131
    %v719 = vunpack.c.l.b16 %v132
    %v720 = vunpack.c.h.b16 %v132
    %v721 = vunpack.c.l.b16 %v133
    %v722 = vunpack.c.h.b16 %v133
    %v723 = vunpack.c.l.b16 %v134
    %v724 = vunpack.c.h.b16 %v134
    %v725 = vunpack.c.l.b16 %v135
    %v726 = vunpack.c.h.b16 %v135
    %v727 = vunpack.c.l.b16 %v136
    %v728 = vunpack.c.h.b16 %v136
    %v729 = vunpack.c.l.b16 %v137
    %v730 = vunpack.c.h.b16 %v137
    %v731 = vunpack.c.l.b16 %v138
    %v732 = vunpack.c.h.b16 %v138
    %v733 = vunpack.c.l.b16 %v139
    %v734 = vunpack.c.h.b16 %v139
    %v735 = vunpack.c.l.b16 %v140
    %v736 = vunpack.c.h.b16 %v140
    %v737 = vunpack.c.l.b16 %v141
    %v738 = vunpack.c.h.b16 %v141
    %v739 = vunpack.c.l.b16 %v142
    %v740 = vunpack.c.h.b16 %v142
    %v741 = vunpack.c.l.b16 %v143
    %v742 = vunpack.c.h.b16 %v143
    %v743 = vunpack.c.l.b16 %v144
    %v744 = vunpack.c.h.b16 %v144
    %v745 = vunpack.c.l.b16 %v145
    %v746 = vunpack.c.h.b16 %v145
    %v747 = vunpack.c.l.b16 %v146
    %v748 = vunpack.c.h.b16 %v146
    %v749 = vunpack.c.l.b16 %v147
    %v750 = vunpack.c.h.b16 %v147
    %v751 = vunpack.c.l.b16 %v148
    %v752 = vunpack.c.h.b16 %v148
    %v753 = vunpack.c.l.b16 %v149
    %v754 = vunpack.c.h.b16 %v149
    %v755 = vunpack.c.l.b16 %v150
    %v756 = vunpack.c.h.b16 %v150
    %v757 = vunpack.c.l.b16 %v151
    %v758 = vunpack.c.h.b16 %v151
    %v759 = vunpack.c.l.b16 %v152
    %v760 = vunpack.c.h.b16 %v152
    %v761 = vunpack.c.l.b16 %v153
    %v762 = vunpack.c.h.b16 %v153
    %v763 = vunpack.c.l.b16 %v154
    %v764 = vunpack.c.h.b16 %v154
    %v765 = vunpack.c.l.b16 %v155
    %v766 = vunpack.c.h.b16 %v155
    %v767 = vunpack.c.l.b16 %v156
    %v768 = vunpack.c.h.b16 %v156
    %v769 = vunpack.c.l.b16 %v157
    %v770 = vunpack.c.h.b16 %v157
    %v771 = vunpack.c.l.b16 %v158
    %v772 = vunpack.c.h.b16 %v158
    %v773 = vunpack.c.l.b16 %v159
    %v774 = vunpack.c.h.b16 %v159
    %v775 = vunpack.c.l.b16 %v160
    %v776 = vunpack.c.h.b16 %v160
    %v777 = vunpack.c.l.b16 %v161
    %v778 = vunpack.c.h.b16 %v161
    %v779 = vunpack.c.l.b16 %v162
    %v780 = vunpack.c.h.b16 %v162
    %v781 = vunpack.c.l.b16 %v163
    %v782 = vunpack.c.h.b16 %v163
    %v783 = vunpack.c.l.b16 %v164
    %v784 = vunpack.c.h.b16 %v164
    %v785 = vunpack.c.l.b16 %v165
    %v786 = vunpack.c.h.b16 %v165
    %v787 = vunpack.c.l.b16 %v166
    %v788 = vunpack.c.h.b16 %v166
    %v789 = vunpack.c.l.b16 %v167
    %v790 = vunpack.c.h.b16 %v167
    %v791 = vunpack.c.l.b16 %v168
    %v792 = vunpack.c.h.b16 %v168
    %v793 = vunpack.c.l.b16 %v169
    %v794 = vunpack.c.h.b16 %v169
    %v795 = vunpack.c.l.b16 %v170
    %v796 = vunpack.c.h.b16 %v170
    %v797 = vunpack.c.l.b16 %v171
    %v798 = vunpack.c.h.b16 %v171
    %v799 = vunpack.c.l.b16 %v172
    %v800 = vunpack.c.h.b16 %v172
    %v801 = vunpack.c.l.b16 %v173
    %v802 = vunpack.c.h.b16 %v173
    %v803 = vunpack.c.l.b16 %v174
    %v804 = vunpack.c.h.b16 %v174
    %v805 = vunpack.c.l.b16 %v175
    %v806 = vunpack.c.h.b16 %v175
    %v807 = vunpack.c.l.b16 %v176
    %v808 = vunpack.c.h.b16 %v176
    %v809 = vunpack.c.l.b16 %v177
    %v810 = vunpack.c.h.b16 %v177
    %v811 = vunpack.c.l.b16 %v178
    %v812 = vunpack.c.h.b16 %v178
    %v813 = vunpack.c.l.b16 %v179
    %v814 = vunpack.c.h.b16 %v179
    %v815 = vunpack.c.l.b16 %v180
    %v816 = vunpack.c.h.b16 %v180
    %v817 = vunpack.c.l.b16 %v181
    %v818 = vunpack.c.h.b16 %v181
    %v819 = vunpack.c.l.b16 %v182
    %v820 = vunpack.c.h.b16 %v182
    %v821 = vunpack.c.l.b16 %v183
    %v822 = vunpack.c.h.b16 %v183
    %v823 = vunpack.c.l.b16 %v184
    %v824 = vunpack.c.h.b16 %v184
    %v825 = vunpack.c.l.b16 %v185
    %v826 = vunpack.c.h.b16 %v185
    %v827 = vunpack.c.l.b16 %v186
    %v828 = vunpack.c.h.b16 %v186
    %v829 = vunpack.c.l.b16 %v187
    %v830 = vunpack.c.h.b16 %v187
    %v831 = vunpack.c.l.b16 %v188
    %v832 = vunpack.c.h.b16 %v188
    %v833 = vunpack.c.l.b16 %v189
    %v834 = vunpack.c.h.b16 %v189
    %v835 = vunpack.c.l.b16 %v190
    %v836 = vunpack.c.h.b16 %v190
    %v837 = vunpack.c.l.b16 %v191
    %v838 = vunpack.c.h.b16 %v191
    %v839 = vunpack.c.l.b16 %v192
    %v840 = vunpack.c.h.b16 %v192
    %v841 = vunpack.c.l.b16 %v193
    %v842 = vunpack.c.h.b16 %v193
    %v843 = vunpack.c.l.b16 %v194
    %v844 = vunpack.c.h.b16 %v194
    %v845 = vunpack.c.l.b16 %v195
    %v846 = vunpack.c.h.b16 %v195
    %v847 = vunpack.c.l.b16 %v196
    %v848 = vunpack.c.h.b16 %v196
    %v849 = vunpack.c.l.b16 %v197
    %v850 = vunpack.c.h.b16 %v197
    %v851 = vunpack.c.l.b16 %v198
    %v852 = vunpack.c.h.b16 %v198
    %v853 = vunpack.c.l.b16 %v199
    %v854 = vunpack.c.h.b16 %v199
    %v855 = vunpack.c.l.b16 %v200
    %v856 = vunpack.c.h.b16 %v200
    %v857 = vunpack.c.l.b16 %v201
    %v858 = vunpack.c.h.b16 %v201
    %v859 = vunpack.c.l.b16 %v202
    %v860 = vunpack.c.h.b16 %v202
    %v861 = vunpack.c.l.b16 %v203
    %v862 = vunpack.c.h.b16 %v203
    %v863 = vunpack.c.l.b16 %v204
    %v864 = vunpack.c.h.b16 %v204
    %v865 = vunpack.c.l.b16 %v205
    %v866 = vunpack.c.h.b16 %v205
    %v867 = vunpack.c.l.b16 %v206
    %v868 = vunpack.c.h.b16 %v206
    %v869 = vunpack.c.l.b16 %v207
    %v870 = vunpack.c.h.b16 %v207
    %v871 = vunpack.c.l.b16 %v208
    %v872 = vunpack.c.h.b16 %v208
    %v873 = vunpack.c.l.b16 %v209
    %v874 = vunpack.c.h.b16 %v209
    %v875 = vunpack.c.l.b16 %v210
    %v876 = vunpack.c.h.b16 %v210
    %v877 = vunpack.c.l.b16 %v211
    %v878 = vunpack.c.h.b16 %v211
    %v879 = vunpack.c.l.b16 %v212
    %v880 = vunpack.c.h.b16 %v212
    %v881 = vunpack.c.l.b16 %v213
    %v882 = vunpack.c.h.b16 %v213
    %v883 = vunpack.c.l.b16 %v214
    %v884 = vunpack.c.h.b16 %v214
    %v885 = vunpack.c.l.b16 %v215
    %v886 = vunpack.c.h.b16 %v215
    %v887 = vunpack.c.l.b16 %v216
    %v888 = vunpack.c.h.b16 %v216
    %v889 = vunpack.c.l.b16 %v217
    %v890 = vunpack.c.h.b16 %v217
    %v891 = vunpack.c.l.b16 %v218
    %v892 = vunpack.c.h.b16 %v218
    %v893 = vunpack.c.l.b16 %v219
    %v894 = vunpack.c.h.b16 %v219
    %v895 = vunpack.c.l.b16 %v220
    %v896 = vunpack.c.h.b16 %v220
    %v897 = vunpack.c.l.b16 %v221
    %v898 = vunpack.c.h.b16 %v221
    %v899 = vunpack.c.l.b16 %v222
    %v900 = vunpack.c.h.b16 %v222
    %v901 = vunpack.c.l.b16 %v223
    %v902 = vunpack.c.h.b16 %v223
    %v903 = vunpack.c.l.b16 %v224
    %v904 = vunpack.c.h.b16 %v224
    %v905 = vunpack.c.l.b16 %v225
    %v906 = vunpack.c.h.b16 %v225
    %v907 = vunpack.c.l.b16 %v226
    %v908 = vunpack.c.h.b16 %v226
    %v909 = vunpack.c.l.b16 %v227
    %v910 = vunpack.c.h.b16 %v227
    %v911 = vunpack.c.l.b16 %v228
    %v912 = vunpack.c.h.b16 %v228
    %v913 = vunpack.c.l.b16 %v229
    %v914 = vunpack.c.h.b16 %v229
    %v915 = vunpack.c.l.b16 %v230
    %v916 = vunpack.c.h.b16 %v230
    %v917 = vunpack.c.l.b16 %v231
    %v918 = vunpack.c.h.b16 %v231
    %v919 = vunpack.c.l.b16 %v232
    %v920 = vunpack.c.h.b16 %v232
    %v921 = vunpack.c.l.b16 %v233
    %v922 = vunpack.c.h.b16 %v233
    %v923 = vunpack.c.l.b16 %v234
    %v924 = vunpack.c.h.b16 %v234
    %v925 = vunpack.c.l.b16 %v235
    %v926 = vunpack.c.h.b16 %v235
    %v927 = vunpack.c.l.b16 %v236
    %v928 = vunpack.c.h.b16 %v236
    %v929 = vunpack.c.l.b16 %v237
    %v930 = vunpack.c.h.b16 %v237
    %v931 = vunpack.c.l.b16 %v238
    %v932 = vunpack.c.h.b16 %v238
    %v933 = vunpack.c.l.b16 %v239
    %v934 = vunpack.c.h.b16 %v239
    %v935 = vunpack.c.l.b16 %v240
    %v936 = vunpack.c.h.b16 %v240
    %v937 = vunpack.c.l.b16 %v241
    %v938 = vunpack.c.h.b16 %v241
    %v939 = vunpack.c.l.b16 %v242
    %v940 = vunpack.c.h.b16 %v242
    %v941 = vunpack.c.l.b16 %v243
    %v942 = vunpack.c.h.b16 %v243
    %v943 = vunpack.c.l.b16 %v244
    %v944 = vunpack.c.h.b16 %v244
    %v945 = vunpack.c.l.b16 %v245
    %v946 = vunpack.c.h.b16 %v245
    %v947 = vunpack.c.l.b16 %v246
    %v948 = vunpack.c.h.b16 %v246
    %v949 = vunpack.c.l.b16 %v247
    %v950 = vunpack.c.h.b16 %v247
    %v951 = vunpack.c.l.b16 %v248
    %v952 = vunpack.c.h.b16 %v248
    %v953 = vunpack.c.l.b16 %v249
    %v954 = vunpack.c.h.b16 %v249
    %v955 = vunpack.c.l.b16 %v250
    %v956 = vunpack.c.h.b16 %v250
    %v957 = vunpack.c.l.b16 %v251
    %v958 = vunpack.c.h.b16 %v251
    %v959 = vunpack.c.l.b16 %v252
    %v960 = vunpack.c.h.b16 %v252
    %v961 = vunpack.c.l.b16 %v253
    %v962 = vunpack.c.h.b16 %v253
    %v963 = vunpack.c.l.b16 %v254
    %v964 = vunpack.c.h.b16 %v254
    %v965 = vunpack.c.l.b16 %v255
    %v966 = vunpack.c.h.b16 %v255
    %v967 = vunpack.c.l.b16 %v256
    %v968 = vunpack.c.h.b16 %v256
    %v969 = vunpack.c.l.b16 %v257
    %v970 = vunpack.c.h.b16 %v257
    %v971 = vunpack.c.l.b16 %v258
    %v972 = vunpack.c.h.b16 %v258
    %v973 = vunpack.c.l.b16 %v259
    %v974 = vunpack.c.h.b16 %v259
    %v975 = vunpack.c.l.b16 %v260
    %v976 = vunpack.c.h.b16 %v260
    %v977 = vunpack.c.l.b16 %v261
    %v978 = vunpack.c.h.b16 %v261
    %v979 = vunpack.c.l.b16 %v262
    %v980 = vunpack.c.h.b16 %v262
    %v981 = vunpack.c.l.b16 %v263
    %v982 = vunpack.c.h.b16 %v263
    %v983 = vunpack.c.l.b16 %v264
    %v984 = vunpack.c.h.b16 %v264
    %v985 = vunpack.c.l.b16 %v265
    %v986 = vunpack.c.h.b16 %v265
    %v987 = vunpack.c.l.b16 %v266
    %v988 = vunpack.c.h.b16 %v266
    %v989 = vunpack.c.l.b16 %v267
    %v990 = vunpack.c.h.b16 %v267
    %v991 = vunpack.c.l.b16 %v268
    %v992 = vunpack.c.h.b16 %v268
    %v993 = vunpack.c.l.b16 %v269
    %v994 = vunpack.c.h.b16 %v269
    %v995 = vunpack.c.l.b16 %v270
    %v996 = vunpack.c.h.b16 %v270
    %v997 = vunpack.c.l.b16 %v271
    %v998 = vunpack.c.h.b16 %v271
    %v999 = vunpack.c.l.b16 %v272
    %v1000 = vunpack.c.h.b16 %v272
    %v1001 = vunpack.c.l.b16 %v273
    %v1002 = vunpack.c.h.b16 %v273
    %v1003 = vunpack.c.l.b16 %v274
    %v1004 = vunpack.c.h.b16 %v274
    %v1005 = vunpack.c.l.b16 %v275
    %v1006 = vunpack.c.h.b16 %v275
    %v1007 = vunpack.c.l.b16 %v276
    %v1008 = vunpack.c.h.b16 %v276
    %v1009 = vunpack.c.l.b16 %v277
    %v1010 = vunpack.c.h.b16 %v277
    %v1011 = vunpack.c.l.b16 %v278
    %v1012 = vunpack.c.h.b16 %v278
    %v1013 = vunpack.c.l.b16 %v279
    %v1014 = vunpack.c.h.b16 %v279
    %v1015 = vunpack.c.l.b16 %v280
    %v1016 = vunpack.c.h.b16 %v280
    %v1017 = vunpack.c.l.b16 %v281
    %v1018 = vunpack.c.h.b16 %v281
    %v1019 = vunpack.c.l.b16 %v282
    %v1020 = vunpack.c.h.b16 %v282
    %v1021 = vunpack.c.l.b16 %v283
    %v1022 = vunpack.c.h.b16 %v283
    %v1023 = vunpack.c.l.b16 %v284
    %v1024 = vunpack.c.h.b16 %v284
    %v1025 = vunpack.c.l.b16 %v285
    %v1026 = vunpack.c.h.b16 %v285
    %v1027 = vunpack.c.l.b16 %v286
    %v1028 = vunpack.c.h.b16 %v286
    %v1029 = vunpack.c.l.b16 %v287
    %v1030 = vunpack.c.h.b16 %v287
    %v1031 = vunpack.c.l.b16 %v288
    %v1032 = vunpack.c.h.b16 %v288
    %v1033 = vunpack.c.l.b16 %v289
    %v1034 = vunpack.c.h.b16 %v289
    %v1035 = vunpack.c.l.b16 %v290
    %v1036 = vunpack.c.h.b16 %v290
    %v1037 = vunpack.c.l.b16 %v291
    %v1038 = vunpack.c.h.b16 %v291
    %v1039 = vunpack.c.l.b16 %v292
    %v1040 = vunpack.c.h.b16 %v292
    %v1041 = vunpack.c.l.b16 %v293
    %v1042 = vunpack.c.h.b16 %v293
    %v1043 = vunpack.c.l.b16 %v294
    %v1044 = vunpack.c.h.b16 %v294
    %v1045 = vunpack.c.l.b16 %v295
    %v1046 = vunpack.c.h.b16 %v295
    %v1047 = vunpack.c.l.b16 %v296
    %v1048 = vunpack.c.h.b16 %v296
    %v1049 = vunpack.c.l.b16 %v297
    %v1050 = vunpack.c.h.b16 %v297
    %v1051 = vunpack.c.l.b16 %v298
    %v1052 = vunpack.c.h.b16 %v298
    %v1053 = vunpack.c.l.b16 %v299
    %v1054 = vunpack.c.h.b16 %v299
    %v1055 = vunpack.c.l.b16 %v300
    %v1056 = vunpack.c.h.b16 %v300
    %v1057 = vunpack.c.l.b16 %v301
    %v1058 = vunpack.c.h.b16 %v301
    %v1059 = vunpack.c.l.b16 %v302
    %v1060 = vunpack.c.h.b16 %v302
    %v1061 = vunpack.c.l.b16 %v303
    %v1062 = vunpack.c.h.b16 %v303
    %v1063 = vunpack.c.l.b16 %v304
    %v1064 = vunpack.c.h.b16 %v304
    %v1065 = vunpack.c.l.b16 %v305
    %v1066 = vunpack.c.h.b16 %v305
    %v1067 = vunpack.c.l.b16 %v306
    %v1068 = vunpack.c.h.b16 %v306
    %v1069 = vunpack.c.l.b16 %v307
    %v1070 = vunpack.c.h.b16 %v307
    %v1071 = vunpack.c.l.b16 %v308
    %v1072 = vunpack.c.h.b16 %v308
    %v1073 = vunpack.c.l.b16 %v309
    %v1074 = vunpack.c.h.b16 %v309
    %v1075 = vunpack.c.l.b16 %v310
    %v1076 = vunpack.c.h.b16 %v310
    %v1077 = vunpack.c.l.b16 %v311
    %v1078 = vunpack.c.h.b16 %v311
    %v1079 = vunpack.c.l.b16 %v312
    %v1080 = vunpack.c.h.b16 %v312
    %v1081 = vunpack.c.l.b16 %v313
    %v1082 = vunpack.c.h.b16 %v313
    %v1083 = vunpack.c.l.b16 %v314
    %v1084 = vunpack.c.h.b16 %v314
    %v1085 = vunpack.c.l.b16 %v315
    %v1086 = vunpack.c.h.b16 %v315
    %v1087 = vunpack.c.l.b16 %v316
    %v1088 = vunpack.c.h.b16 %v316
    %v1089 = vunpack.c.l.b16 %v317
    %v1090 = vunpack.c.h.b16 %v317
    %v1091 = vunpack.c.l.b16 %v318
    %v1092 = vunpack.c.h.b16 %v318
    %v1093 = vunpack.c.l.b16 %v319
    %v1094 = vunpack.c.h.b16 %v319
    %v1095 = vunpack.c.l.b16 %v320
    %v1096 = vunpack.c.h.b16 %v320
    %v1097 = vunpack.c.l.b16 %v321
    %v1098 = vunpack.c.h.b16 %v321
    %v1099 = vunpack.c.l.b16 %v322
    %v1100 = vunpack.c.h.b16 %v322
    %v1101 = vunpack.c.l.b16 %v323
    %v1102 = vunpack.c.h.b16 %v323
    %v1103 = vunpack.c.l.b16 %v324
    %v1104 = vunpack.c.h.b16 %v324
    %v1105 = vunpack.c.l.b16 %v325
    %v1106 = vunpack.c.h.b16 %v325
    %v1107 = vunpack.c.l.b16 %v326
    %v1108 = vunpack.c.h.b16 %v326
    %v1109 = vunpack.c.l.b16 %v327
    %v1110 = vunpack.c.h.b16 %v327
    %v1111 = vunpack.c.l.b16 %v328
    %v1112 = vunpack.c.h.b16 %v328
    %v1113 = vunpack.c.l.b16 %v329
    %v1114 = vunpack.c.h.b16 %v329
    %v1115 = vunpack.c.l.b16 %v330
    %v1116 = vunpack.c.h.b16 %v330
    %v1117 = vunpack.c.l.b16 %v331
    %v1118 = vunpack.c.h.b16 %v331
    %v1119 = vunpack.c.l.b16 %v332
    %v1120 = vunpack.c.h.b16 %v332
    %v1121 = vunpack.c.l.b16 %v333
    %v1122 = vunpack.c.h.b16 %v333
    %v1123 = vunpack.c.l.b16 %v334
    %v1124 = vunpack.c.h.b16 %v334
    %v1125 = vpack.c.b16 %v617, %v613
    %v1126 = vpack.c.b16 %v618, %v614
    %v1127 = vpack.c.b16 %v619, %v615
    %v1128 = vpack.c.b16 %v620, %v616
    %v1129 = vpack.c.b16 %v625, %v621
    %v1130 = vpack.c.b16 %v626, %v622
    %v1131 = vpack.c.b16 %v627, %v623
    %v1132 = vpack.c.b16 %v628, %v624
    %v1133 = vpack.c.b16 %v633, %v629
    %v1134 = vpack.c.b16 %v634, %v630
    %v1135 = vpack.c.b16 %v635, %v631
    %v1136 = vpack.c.b16 %v636, %v632
    %v1137 = vpack.c.b16 %v641, %v637
    %v1138 = vpack.c.b16 %v642, %v638
    %v1139 = vpack.c.b16 %v643, %v639
    %v1140 = vpack.c.b16 %v644, %v640
    %v1141 = vpack.c.b16 %v649, %v645
    %v1142 = vpack.c.b16 %v650, %v646
    %v1143 = vpack.c.b16 %v651, %v647
    %v1144 = vpack.c.b16 %v652, %v648
    %v1145 = vpack.c.b16 %v657, %v653
    %v1146 = vpack.c.b16 %v658, %v654
    %v1147 = vpack.c.b16 %v659, %v655
    %v1148 = vpack.c.b16 %v660, %v656
    %v1149 = vpack.c.b16 %v665, %v661
    %v1150 = vpack.c.b16 %v666, %v662
    %v1151 = vpack.c.b16 %v667, %v663
    %v1152 = vpack.c.b16 %v668, %v664
    %v1153 = vpack.c.b16 %v673, %v669
    %v1154 = vpack.c.b16 %v674, %v670
    %v1155 = vpack.c.b16 %v675, %v671
    %v1156 = vpack.c.b16 %v676, %v672
    %v1157 = vpack.c.b16 %v681, %v677
    %v1158 = vpack.c.b16 %v682, %v678
    %v1159 = vpack.c.b16 %v683, %v679
    %v1160 = vpack.c.b16 %v684, %v680
    %v1161 = vpack.c.b16 %v689, %v685
    %v1162 = vpack.c.b16 %v690, %v686
    %v1163 = vpack.c.b16 %v691, %v687
    %v1164 = vpack.c.b16 %v692, %v688
    %v1165 = vpack.c.b16 %v697, %v693
    %v1166 = vpack.c.b16 %v698, %v694
    %v1167 = vpack.c.b16 %v699, %v695
    %v1168 = vpack.c.b16 %v700, %v696
    %v1169 = vpack.c.b16 %v705, %v701
    %v1170 = vpack.c.b16 %v706, %v702
    %v1171 = vpack.c.b16 %v707, %v703
    %v1172 = vpack.c.b16 %v708, %v704
    %v1173 = vpack.c.b16 %v713, %v709
    %v1174 = vpack.c.b16 %v714, %v710
    %v1175 = vpack.c.b16 %v715, %v711
    %v1176 = vpack.c.b16 %v716, %v712
    %v1177 = vpack.c.b16 %v721, %v717
    %v1178 = vpack.c.b16 %v722, %v718
    %v1179 = vpack.c.b16 %v723, %v719
    %v1180 = vpack.c.b16 %v724, %v720
    %v1181 = vpack.c.b16 %v729, %v725
    %v1182 = vpack.c.b16 %v730, %v726
    %v1183 = vpack.c.b16 %v731, %v727
    %v1184 = vpack.c.b16 %v732, %v728
    %v1185 = vpack.c.b16 %v737, %v733
    %v1186 = vpack.c.b16 %v738, %v734
    %v1187 = vpack.c.b16 %v739, %v735
    %v1188 = vpack.c.b16 %v740, %v736
    %v1189 = vpack.c.b16 %v745, %v741
    %v1190 = vpack.c.b16 %v746, %v742
    %v1191 = vpack.c.b16 %v747, %v743
    %v1192 = vpack.c.b16 %v748, %v744
    %v1193 = vpack.c.b16 %v753, %v749
    %v1194 = vpack.c.b16 %v754, %v750
    %v1195 = vpack.c.b16 %v755, %v751
    %v1196 = vpack.c.b16 %v756, %v752
    %v1197 = vpack.c.b16 %v761, %v757
    %v1198 = vpack.c.b16 %v762, %v758
    %v1199 = vpack.c.b16 %v763, %v759
    %v1200 = vpack.c.b16 %v764, %v760
    %v1201 = vpack.c.b16 %v769, %v765
    %v1202 = vpack.c.b16 %v770, %v766
    %v1203 = vpack.c.b16 %v771, %v767
    %v1204 = vpack.c.b16 %v772, %v768
    %v1205 = vpack.c.b16 %v777, %v773
    %v1206 = vpack.c.b16 %v778, %v774
    %v1207 = vpack.c.b16 %v779, %v775
    %v1208 = vpack.c.b16 %v780, %v776
    %v1209 = vpack.c.b16 %v785, %v781
    %v1210 = vpack.c.b16 %v786, %v782
    %v1211 = vpack.c.b16 %v787, %v783
    %v1212 = vpack.c.b16 %v788, %v784
    %v1213 = vpack.c.b16 %v793, %v789
    %v1214 = vpack.c.b16 %v794, %v790
    %v1215 = vpack.c.b16 %v795, %v791
    %v1216 = vpack.c.b16 %v796, %v792
    %v1217 = vpack.c.b16 %v801, %v797
    %v1218 = vpack.c.b16 %v802, %v798
    %v1219 = vpack.c.b16 %v803, %v799
    %v1220 = vpack.c.b16 %v804, %v800
    %v1221 = vpack.c.b16 %v809, %v805
    %v1222 = vpack.c.b16 %v810, %v806
    %v1223 = vpack.c.b16 %v811, %v807
    %v1224 = vpack.c.b16 %v812, %v808
    %v1225 = vpack.c.b16 %v817, %v813
    %v1226 = vpack.c.b16 %v818, %v814
    %v1227 = vpack.c.b16 %v819, %v815
    %v1228 = vpack.c.b16 %v820, %v816
    %v1229 = vpack.c.b16 %v825, %v821
    %v1230 = vpack.c.b16 %v826, %v822
    %v1231 = vpack.c.b16 %v827, %v823
    %v1232 = vpack.c.b16 %v828, %v824
    %v1233 = vpack.c.b16 %v833, %v829
    %v1234 = vpack.c.b16 %v834, %v830
    %v1235 = vpack.c.b16 %v835, %v831
    %v1236 = vpack.c.b16 %v836, %v832
    %v1237 = vpack.c.b16 %v841, %v837
    %v1238 = vpack.c.b16 %v842, %v838
    %v1239 = vpack.c.b16 %v843, %v839
    %v1240 = vpack.c.b16 %v844, %v840
    %v1241 = vpack.c.b16 %v849, %v845
    %v1242 = vpack.c.b16 %v850, %v846
    %v1243 = vpack.c.b16 %v851, %v847
    %v1244 = vpack.c.b16 %v852, %v848
    %v1245 = vpack.c.b16 %v857, %v853
    %v1246 = vpack.c.b16 %v858, %v854
    %v1247 = vpack.c.b16 %v859, %v855
    %v1248 = vpack.c.b16 %v860, %v856
    %v1249 = vpack.c.b16 %v865, %v861
    %v1250 = vpack.c.b16 %v866, %v862
    %v1251 = vpack.c.b16 %v867, %v863
    %v1252 = vpack.c.b16 %v868, %v864
    %v1253 = vpack.c.b16 %v873, %v869
    %v1254 = vpack.c.b16 %v874, %v870
    %v1255 = vpack.c.b16 %v875, %v871
    %v1256 = vpack.c.b16 %v876, %v872
    %v1257 = vpack.c.b16 %v881, %v877
    %v1258 = vpack.c.b16 %v882, %v878
    %v1259 = vpack.c.b16 %v883, %v879
    %v1260 = vpack.c.b16 %v884, %v880
    %v1261 = vpack.c.b16 %v889, %v885
    %v1262 = vpack.c.b16 %v890, %v886
    %v1263 = vpack.c.b16 %v891, %v887
    %v1264 = vpack.c.b16 %v892, %v888
    %v1265 = vpack.c.b16 %v897, %v893
    %v1266 = vpack.c.b16 %v898, %v894
    %v1267 = vpack.c.b16 %v899, %v895
    %v1268 = vpack.c.b16 %v900, %v896
    %v1269 = vpack.c.b16 %v905, %v901
    %v1270 = vpack.c.b16 %v906, %v902
    %v1271 = vpack.c.b16 %v907, %v903
    %v1272 = vpack.c.b16 %v908, %v904
    %v1273 = vpack.c.b16 %v913, %v909
    %v1274 = vpack.c.b16 %v914, %v910
    %v1275 = vpack.c.b16 %v915, %v911
    %v1276 = vpack.c.b16 %v916, %v912
    %v1277 = vpack.c.b16 %v921, %v917
    %v1278 = vpack.c.b16 %v922, %v918
    %v1279 = vpack.c.b16 %v923, %v919
    %v1280 = vpack.c.b16 %v924, %v920
    %v1281 = vpack.c.b16 %v929, %v925
    %v1282 = vpack.c.b16 %v930, %v926
    %v1283 = vpack.c.b16 %v931, %v927
    %v1284 = vpack.c.b16 %v932, %v928
    %v1285 = vpack.c.b16 %v937, %v933
    %v1286 = vpack.c.b16 %v938, %v934
    %v1287 = vpack.c.b16 %v939, %v935
    %v1288 = vpack.c.b16 %v940, %v936
    %v1289 = vpack.c.b16 %v945, %v941
    %v1290 = vpack.c.b16 %v946, %v942
    %v1291 = vpack.c.b16 %v947, %v943
    %v1292 = vpack.c.b16 %v948, %v944
    %v1293 = vpack.c.b16 %v953, %v949
    %v1294 = vpack.c.b16 %v954, %v950
    %v1295 = vpack.c.b16 %v955, %v951
    %v1296 = vpack.c.b16 %v956, %v952
    %v1297 = vpack.c.b16 %v961, %v957
    %v1298 = vpack.c.b16 %v962, %v958
    %v1299 = vpack.c.b16 %v963, %v959
    %v1300 = vpack.c.b16 %v964, %v960
    %v1301 = vpack.c.b16 %v969, %v965
    %v1302 = vpack.c.b16 %v970, %v966
    %v1303 = vpack.c.b16 %v971, %v967
    %v1304 = vpack.c.b16 %v972, %v968
    %v1305 = vpack.c.b16 %v977, %v973
    %v1306 = vpack.c.b16 %v978, %v974
    %v1307 = vpack.c.b16 %v979, %v975
    %v1308 = vpack.c.b16 %v980, %v976
    %v1309 = vpack.c.b16 %v985, %v981
    %v1310 = vpack.c.b16 %v986, %v982
    %v1311 = vpack.c.b16 %v987, %v983
    %v1312 = vpack.c.b16 %v988, %v984
    %v1313 = vpack.c.b16 %v993, %v989
    %v1314 = vpack.c.b16 %v994, %v990
    %v1315 = vpack.c.b16 %v995, %v991
    %v1316 = vpack.c.b16 %v996, %v992
    %v1317 = vpack.c.b16 %v1001, %v997
    %v1318 = vpack.c.b16 %v1002, %v998
    %v1319 = vpack.c.b16 %v1003, %v999
    %v1320 = vpack.c.b16 %v1004, %v1000
    %v1321 = vpack.c.b16 %v1009, %v1005
    %v1322 = vpack.c.b16 %v1010, %v1006
    %v1323 = vpack.c.b16 %v1011, %v1007
    %v1324 = vpack.c.b16 %v1012, %v1008
    %v1325 = vpack.c.b16 %v1017, %v1013
    %v1326 = vpack.c.b16 %v1018, %v1014
    %v1327 = vpack.c.b16 %v1019, %v1015
    %v1328 = vpack.c.b16 %v1020, %v1016
    %v1329 = vpack.c.b16 %v1025, %v1021
    %v1330 = vpack.c.b16 %v1026, %v1022
    %v1331 = vpack.c.b16 %v1027, %v1023
    %v1332 = vpack.c.b16 %v1028, %v1024
    %v1333 = vpack.c.b16 %v1033, %v1029
    %v1334 = vpack.c.b16 %v1034, %v1030
    %v1335 = vpack.c.b16 %v1035, %v1031
    %v1336 = vpack.c.b16 %v1036, %v1032
    %v1337 = vpack.c.b16 %v1041, %v1037
    %v1338 = vpack.c.b16 %v1042, %v1038
    %v1339 = vpack.c.b16 %v1043, %v1039
    %v1340 = vpack.c.b16 %v1044, %v1040
    %v1341 = vpack.c.b16 %v1049, %v1045
    %v1342 = vpack.c.b16 %v1050, %v1046
    %v1343 = vpack.c.b16 %v1051, %v1047
    %v1344 = vpack.c.b16 %v1052, %v1048
    %v1345 = vpack.c.b16 %v1057, %v1053
    %v1346 = vpack.c.b16 %v1058, %v1054
    %v1347 = vpack.c.b16 %v1059, %v1055
    %v1348 = vpack.c.b16 %v1060, %v1056
    %v1349 = vpack.c.b16 %v1065, %v1061
    %v1350 = vpack.c.b16 %v1066, %v1062
    %v1351 = vpack.c.b16 %v1067, %v1063
    %v1352 = vpack.c.b16 %v1068, %v1064
    %v1353 = vpack.c.b16 %v1073, %v1069
    %v1354 = vpack.c.b16 %v1074, %v1070
    %v1355 = vpack.c.b16 %v1075, %v1071
    %v1356 = vpack.c.b16 %v1076, %v1072
    %v1357 = vpack.c.b16 %v1081, %v1077
    %v1358 = vpack.c.b16 %v1082, %v1078
    %v1359 = vpack.c.b16 %v1083, %v1079
    %v1360 = vpack.c.b16 %v1084, %v1080
    %v1361 = vpack.c.b16 %v1089, %v1085
    %v1362 = vpack.c.b16 %v1090, %v1086
    %v1363 = vpack.c.b16 %v1091, %v1087
    %v1364 = vpack.c.b16 %v1092, %v1088
    %v1365 = vpack.c.b16 %v1097, %v1093
    %v1366 = vpack.c.b16 %v1098, %v1094
    %v1367 = vpack.c.b16 %v1099, %v1095
    %v1368 = vpack.c.b16 %v1100, %v1096
    %v1369 = vpack.c.b16 %v1105, %v1101
    %v1370 = vpack.c.b16 %v1106, %v1102
    %v1371 = vpack.c.b16 %v1107, %v1103
    %v1372 = vpack.c.b16 %v1108, %v1104
    %v1373 = vpack.c.b16 %v1113, %v1109
    %v1374 = vpack.c.b16 %v1114, %v1110
    %v1375 = vpack.c.b16 %v1115, %v1111
    %v1376 = vpack.c.b16 %v1116, %v1112
    %v1377 = vpack.c.b16 %v1121, %v1117
    %v1378 = vpack.c.b16 %v1122, %v1118
    %v1379 = vpack.c.b16 %v1123, %v1119
    %v1380 = vpack.c.b16 %v1124, %v1120
    %1637 = vmatprep.subr.bf16.mxu0 %v1126
    %1638 = vmatpush1.bf16.msra.mxu0 %v1125
    %1639 = vmatprep.subr.bf16.mxu0 %v1130
    %1640 = vmatpush1.bf16.msra.mxu0 %v1129
    %1641 = vmatprep.subr.bf16.mxu0 %v1134
    %1642 = vmatpush1.bf16.msra.mxu0 %v1133
    %1643 = vmatprep.subr.bf16.mxu0 %v1138
    %1644 = vmatpush1.bf16.msra.mxu0 %v1137
    %1645 = vmatprep.subr.bf16.mxu0 %v1142
    %1646 = vmatpush1.bf16.msra.mxu0 %v1141
    %1647 = vmatprep.subr.bf16.mxu0 %v1146
    %1648 = vmatpush1.bf16.msra.mxu0 %v1145
    %1649 = vmatprep.subr.bf16.mxu0 %v1150
    %1650 = vmatpush1.bf16.msra.mxu0 %v1149
    %1651 = vmatprep.subr.bf16.mxu0 %v1154
    %1652 = vmatpush1.bf16.msra.mxu0 %v1153
    %1653 = vmatprep.subr.bf16.mxu0 %v1158
    %1654 = vmatpush1.bf16.msra.mxu0 %v1157
    %1655 = vmatprep.subr.bf16.mxu0 %v1162
    %1656 = vmatpush1.bf16.msra.mxu0 %v1161
    %1657 = vmatprep.subr.bf16.mxu0 %v1166
    %1658 = vmatpush1.bf16.msra.mxu0 %v1165
    %1659 = vmatprep.subr.bf16.mxu0 %v1170
    %1660 = vmatpush1.bf16.msra.mxu0 %v1169
    %1661 = vmatprep.subr.bf16.mxu0 %v1174
    %1662 = vmatpush1.bf16.msra.mxu0 %v1173
    %1663 = vmatprep.subr.bf16.mxu0 %v1178
    %1664 = vmatpush1.bf16.msra.mxu0 %v1177
    %1665 = vmatprep.subr.bf16.mxu0 %v1182
    %1666 = vmatpush1.bf16.msra.mxu0 %v1181
    %1667 = vmatprep.subr.bf16.mxu0 %v1186
    %1668 = vmatpush1.bf16.msra.mxu0 %v1185
    %1669 = vmatprep.mubr.bf16.mxu0 %v72
    %1670 = vmatmul.mubr.bf16.gmra.mrb[0].mxu0 %v71
    %v1671 = vpop.f32.mrb[0].mxu0
    %v1672 = vadd.f32 %v340, %v1671
    %v1673 = vpop.f32.mrb[0].mxu0
    %v1674 = vadd.f32 %v344, %v1673
    %v1675 = vpop.f32.mrb[0].mxu0
    %v1676 = vpop.f32.mrb[0].mxu0
    %1677 = vdwg.mxu0
    %1678 = vmatprep.subr.bf16.mxu0 %v1190
    %1679 = vmatpush1.bf16.msra.mxu0 %v1189
    %1680 = vmatprep.subr.bf16.mxu0 %v1194
    %1681 = vmatpush1.bf16.msra.mxu0 %v1193
    %1682 = vmatprep.subr.bf16.mxu0 %v1198
    %1683 = vmatpush1.bf16.msra.mxu0 %v1197
    %1684 = vmatprep.subr.bf16.mxu0 %v1202
    %1685 = vmatpush1.bf16.msra.mxu0 %v1201
    %1686 = vmatprep.subr.bf16.mxu0 %v1206
    %1687 = vmatpush1.bf16.msra.mxu0 %v1205
    %1688 = vmatprep.subr.bf16.mxu0 %v1210
    %1689 = vmatpush1.bf16.msra.mxu0 %v1209
    %1690 = vmatprep.subr.bf16.mxu0 %v1214
    %1691 = vmatpush1.bf16.msra.mxu0 %v1213
    %1692 = vmatprep.subr.bf16.mxu0 %v1218
    %1693 = vmatpush1.bf16.msra.mxu0 %v1217
    %1694 = vmatprep.subr.bf16.mxu0 %v1222
    %1695 = vmatpush1.bf16.msra.mxu0 %v1221
    %1696 = vmatprep.subr.bf16.mxu0 %v1226
    %1697 = vmatpush1.bf16.msra.mxu0 %v1225
    %1698 = vmatprep.subr.bf16.mxu0 %v1230
    %1699 = vmatpush1.bf16.msra.mxu0 %v1229
    %1700 = vmatprep.subr.bf16.mxu0 %v1234
    %1701 = vmatpush1.bf16.msra.mxu0 %v1233
    %1702 = vmatprep.subr.bf16.mxu0 %v1238
    %1703 = vmatpush1.bf16.msra.mxu0 %v1237
    %1704 = vmatprep.subr.bf16.mxu0 %v1242
    %1705 = vmatpush1.bf16.msra.mxu0 %v1241
    %1706 = vmatprep.subr.bf16.mxu0 %v1246
    %1707 = vmatpush1.bf16.msra.mxu0 %v1245
    %1708 = vmatprep.subr.bf16.mxu0 %v1250
    %1709 = vmatpush1.bf16.msra.mxu0 %v1249
    %1710 = vmatprep.mubr.bf16.mxu0 %v74
    %1711 = vmatmul.mubr.bf16.gmra.mrb[0].mxu0 %v73
    %v1712 = vpop.f32.mrb[0].mxu0
    %v1713 = vadd.f32 %v1672, %v1712
    %v1714 = vpop.f32.mrb[0].mxu0
    %v1715 = vadd.f32 %v1674, %v1714
    %v1716 = vpop.f32.mrb[0].mxu0
    %v1717 = vpop.f32.mrb[0].mxu0
    %1718 = vdwg.mxu0
    %1719 = vmatprep.subr.bf16.mxu0 %v1254
    %1720 = vmatpush1.bf16.msra.mxu0 %v1253
    %1721 = vmatprep.subr.bf16.mxu0 %v1258
    %1722 = vmatpush1.bf16.msra.mxu0 %v1257
    %1723 = vmatprep.subr.bf16.mxu0 %v1262
    %1724 = vmatpush1.bf16.msra.mxu0 %v1261
    %1725 = vmatprep.subr.bf16.mxu0 %v1266
    %1726 = vmatpush1.bf16.msra.mxu0 %v1265
    %1727 = vmatprep.subr.bf16.mxu0 %v1270
    %1728 = vmatpush1.bf16.msra.mxu0 %v1269
    %1729 = vmatprep.subr.bf16.mxu0 %v1274
    %1730 = vmatpush1.bf16.msra.mxu0 %v1273
    %1731 = vmatprep.subr.bf16.mxu0 %v1278
    %1732 = vmatpush1.bf16.msra.mxu0 %v1277
    %1733 = vmatprep.subr.bf16.mxu0 %v1282
    %1734 = vmatpush1.bf16.msra.mxu0 %v1281
    %1735 = vmatprep.subr.bf16.mxu0 %v1286
    %1736 = vmatpush1.bf16.msra.mxu0 %v1285
    %1737 = vmatprep.subr.bf16.mxu0 %v1290
    %1738 = vmatpush1.bf16.msra.mxu0 %v1289
    %1739 = vmatprep.subr.bf16.mxu0 %v1294
    %1740 = vmatpush1.bf16.msra.mxu0 %v1293
    %1741 = vmatprep.subr.bf16.mxu0 %v1298
    %1742 = vmatpush1.bf16.msra.mxu0 %v1297
    %1743 = vmatprep.subr.bf16.mxu0 %v1302
    %1744 = vmatpush1.bf16.msra.mxu0 %v1301
    %1745 = vmatprep.subr.bf16.mxu0 %v1306
    %1746 = vmatpush1.bf16.msra.mxu0 %v1305
    %1747 = vmatprep.subr.bf16.mxu0 %v1310
    %1748 = vmatpush1.bf16.msra.mxu0 %v1309
    %1749 = vmatprep.subr.bf16.mxu0 %v1314
    %1750 = vmatpush1.bf16.msra.mxu0 %v1313
    %1751 = vmatprep.mubr.bf16.mxu0 %v76
    %1752 = vmatmul.mubr.bf16.gmra.mrb[0].mxu0 %v75
    %v1753 = vpop.f32.mrb[0].mxu0
    %v1754 = vadd.f32 %v1713, %v1753
    %v1755 = vpop.f32.mrb[0].mxu0
    %v1756 = vadd.f32 %v1715, %v1755
    %v1757 = vpop.f32.mrb[0].mxu0
    %v1758 = vpop.f32.mrb[0].mxu0
    %1759 = vdwg.mxu0
    %1760 = vmatprep.subr.bf16.mxu0 %v1318
    %1761 = vmatpush1.bf16.msra.mxu0 %v1317
    %1762 = vmatprep.subr.bf16.mxu0 %v1322
    %1763 = vmatpush1.bf16.msra.mxu0 %v1321
    %1764 = vmatprep.subr.bf16.mxu0 %v1326
    %1765 = vmatpush1.bf16.msra.mxu0 %v1325
    %1766 = vmatprep.subr.bf16.mxu0 %v1330
    %1767 = vmatpush1.bf16.msra.mxu0 %v1329
    %1768 = vmatprep.subr.bf16.mxu0 %v1334
    %1769 = vmatpush1.bf16.msra.mxu0 %v1333
    %1770 = vmatprep.subr.bf16.mxu0 %v1338
    %1771 = vmatpush1.bf16.msra.mxu0 %v1337
    %1772 = vmatprep.subr.bf16.mxu0 %v1342
    %1773 = vmatpush1.bf16.msra.mxu0 %v1341
    %1774 = vmatprep.subr.bf16.mxu0 %v1346
    %1775 = vmatpush1.bf16.msra.mxu0 %v1345
    %1776 = vmatprep.subr.bf16.mxu0 %v1350
    %1777 = vmatpush1.bf16.msra.mxu0 %v1349
    %1778 = vmatprep.subr.bf16.mxu0 %v1354
    %1779 = vmatpush1.bf16.msra.mxu0 %v1353
    %1780 = vmatprep.subr.bf16.mxu0 %v1358
    %1781 = vmatpush1.bf16.msra.mxu0 %v1357
    %1782 = vmatprep.subr.bf16.mxu0 %v1362
    %1783 = vmatpush1.bf16.msra.mxu0 %v1361
    %1784 = vmatprep.subr.bf16.mxu0 %v1366
    %1785 = vmatpush1.bf16.msra.mxu0 %v1365
    %1786 = vmatprep.subr.bf16.mxu0 %v1370
    %1787 = vmatpush1.bf16.msra.mxu0 %v1369
    %1788 = vmatprep.subr.bf16.mxu0 %v1374
    %1789 = vmatpush1.bf16.msra.mxu0 %v1373
    %1790 = vmatprep.subr.bf16.mxu0 %v1378
    %1791 = vmatpush1.bf16.msra.mxu0 %v1377
    %1792 = vmatprep.mubr.bf16.mxu0 %v78
    %1793 = vmatmul.mubr.bf16.gmra.mrb[0].mxu0 %v77
    %v1794 = vpop.f32.mrb[0].mxu0
    %v1795 = vadd.f32 %v1754, %v1794
    %v1796 = vpop.f32.mrb[0].mxu0
    %v1797 = vadd.f32 %v1756, %v1796
    %v1798 = vpop.f32.mrb[0].mxu0
    %v1799 = vpop.f32.mrb[0].mxu0
    %1800 = vdwg.mxu0
    %1801 = vmatprep.subr.bf16.mxu0 %v1128
    %1802 = vmatpush1.bf16.msra.mxu0 %v1127
    %1803 = vmatprep.subr.bf16.mxu0 %v1132
    %1804 = vmatpush1.bf16.msra.mxu0 %v1131
    %1805 = vmatprep.subr.bf16.mxu0 %v1136
    %1806 = vmatpush1.bf16.msra.mxu0 %v1135
    %1807 = vmatprep.subr.bf16.mxu0 %v1140
    %1808 = vmatpush1.bf16.msra.mxu0 %v1139
    %1809 = vmatprep.subr.bf16.mxu0 %v1144
    %1810 = vmatpush1.bf16.msra.mxu0 %v1143
    %1811 = vmatprep.subr.bf16.mxu0 %v1148
    %1812 = vmatpush1.bf16.msra.mxu0 %v1147
    %1813 = vmatprep.subr.bf16.mxu0 %v1152
    %1814 = vmatpush1.bf16.msra.mxu0 %v1151
    %1815 = vmatprep.subr.bf16.mxu0 %v1156
    %1816 = vmatpush1.bf16.msra.mxu0 %v1155
    %1817 = vmatprep.subr.bf16.mxu0 %v1160
    %1818 = vmatpush1.bf16.msra.mxu0 %v1159
    %1819 = vmatprep.subr.bf16.mxu0 %v1164
    %1820 = vmatpush1.bf16.msra.mxu0 %v1163
    %1821 = vmatprep.subr.bf16.mxu0 %v1168
    %1822 = vmatpush1.bf16.msra.mxu0 %v1167
    %1823 = vmatprep.subr.bf16.mxu0 %v1172
    %1824 = vmatpush1.bf16.msra.mxu0 %v1171
    %1825 = vmatprep.subr.bf16.mxu0 %v1176
    %1826 = vmatpush1.bf16.msra.mxu0 %v1175
    %1827 = vmatprep.subr.bf16.mxu0 %v1180
    %1828 = vmatpush1.bf16.msra.mxu0 %v1179
    %1829 = vmatprep.subr.bf16.mxu0 %v1184
    %1830 = vmatpush1.bf16.msra.mxu0 %v1183
    %1831 = vmatprep.subr.bf16.mxu0 %v1188
    %1832 = vmatpush1.bf16.msra.mxu0 %v1187
    %1833 = vmatprep.mubr.bf16.mxu0 %v72
    %1834 = vmatmul.mubr.bf16.gmra.mrb[0].mxu0 %v71
    %v1835 = vpop.f32.mrb[0].mxu0
    %v1836 = vadd.f32 %v348, %v1835
    %v1837 = vpop.f32.mrb[0].mxu0
    %v1838 = vadd.f32 %v352, %v1837
    %v1839 = vpop.f32.mrb[0].mxu0
    %v1840 = vpop.f32.mrb[0].mxu0
    %1841 = vdwg.mxu0
    %1842 = vmatprep.subr.bf16.mxu0 %v1192
    %1843 = vmatpush1.bf16.msra.mxu0 %v1191
    %1844 = vmatprep.subr.bf16.mxu0 %v1196
    %1845 = vmatpush1.bf16.msra.mxu0 %v1195
    %1846 = vmatprep.subr.bf16.mxu0 %v1200
    %1847 = vmatpush1.bf16.msra.mxu0 %v1199
    %1848 = vmatprep.subr.bf16.mxu0 %v1204
    %1849 = vmatpush1.bf16.msra.mxu0 %v1203
    %1850 = vmatprep.subr.bf16.mxu0 %v1208
    %1851 = vmatpush1.bf16.msra.mxu0 %v1207
    %1852 = vmatprep.subr.bf16.mxu0 %v1212
    %1853 = vmatpush1.bf16.msra.mxu0 %v1211
    %1854 = vmatprep.subr.bf16.mxu0 %v1216
    %1855 = vmatpush1.bf16.msra.mxu0 %v1215
    %1856 = vmatprep.subr.bf16.mxu0 %v1220
    %1857 = vmatpush1.bf16.msra.mxu0 %v1219
    %1858 = vmatprep.subr.bf16.mxu0 %v1224
    %1859 = vmatpush1.bf16.msra.mxu0 %v1223
    %1860 = vmatprep.subr.bf16.mxu0 %v1228
    %1861 = vmatpush1.bf16.msra.mxu0 %v1227
    %1862 = vmatprep.subr.bf16.mxu0 %v1232
    %1863 = vmatpush1.bf16.msra.mxu0 %v1231
    %1864 = vmatprep.subr.bf16.mxu0 %v1236
    %1865 = vmatpush1.bf16.msra.mxu0 %v1235
    %1866 = vmatprep.subr.bf16.mxu0 %v1240
    %1867 = vmatpush1.bf16.msra.mxu0 %v1239
    %1868 = vmatprep.subr.bf16.mxu0 %v1244
    %1869 = vmatpush1.bf16.msra.mxu0 %v1243
    %1870 = vmatprep.subr.bf16.mxu0 %v1248
    %1871 = vmatpush1.bf16.msra.mxu0 %v1247
    %1872 = vmatprep.subr.bf16.mxu0 %v1252
    %1873 = vmatpush1.bf16.msra.mxu0 %v1251
    %1874 = vmatprep.mubr.bf16.mxu0 %v74
    %1875 = vmatmul.mubr.bf16.gmra.mrb[0].mxu0 %v73
    %v1876 = vpop.f32.mrb[0].mxu0
    %v1877 = vadd.f32 %v1836, %v1876
    %v1878 = vpop.f32.mrb[0].mxu0
    %v1879 = vadd.f32 %v1838, %v1878
    %v1880 = vpop.f32.mrb[0].mxu0
    %v1881 = vpop.f32.mrb[0].mxu0
    %1882 = vdwg.mxu0
    %1883 = vmatprep.subr.bf16.mxu0 %v1256
    %1884 = vmatpush1.bf16.msra.mxu0 %v1255
    %1885 = vmatprep.subr.bf16.mxu0 %v1260
    %1886 = vmatpush1.bf16.msra.mxu0 %v1259
    %1887 = vmatprep.subr.bf16.mxu0 %v1264
    %1888 = vmatpush1.bf16.msra.mxu0 %v1263
    %1889 = vmatprep.subr.bf16.mxu0 %v1268
    %1890 = vmatpush1.bf16.msra.mxu0 %v1267
    %1891 = vmatprep.subr.bf16.mxu0 %v1272
    %1892 = vmatpush1.bf16.msra.mxu0 %v1271
    %1893 = vmatprep.subr.bf16.mxu0 %v1276
    %1894 = vmatpush1.bf16.msra.mxu0 %v1275
    %1895 = vmatprep.subr.bf16.mxu0 %v1280
    %1896 = vmatpush1.bf16.msra.mxu0 %v1279
    %1897 = vmatprep.subr.bf16.mxu0 %v1284
    %1898 = vmatpush1.bf16.msra.mxu0 %v1283
    %1899 = vmatprep.subr.bf16.mxu0 %v1288
    %1900 = vmatpush1.bf16.msra.mxu0 %v1287
    %1901 = vmatprep.subr.bf16.mxu0 %v1292
    %1902 = vmatpush1.bf16.msra.mxu0 %v1291
    %1903 = vmatprep.subr.bf16.mxu0 %v1296
    %1904 = vmatpush1.bf16.msra.mxu0 %v1295
    %1905 = vmatprep.subr.bf16.mxu0 %v1300
    %1906 = vmatpush1.bf16.msra.mxu0 %v1299
    %1907 = vmatprep.subr.bf16.mxu0 %v1304
    %1908 = vmatpush1.bf16.msra.mxu0 %v1303
    %1909 = vmatprep.subr.bf16.mxu0 %v1308
    %1910 = vmatpush1.bf16.msra.mxu0 %v1307
    %1911 = vmatprep.subr.bf16.mxu0 %v1312
    %1912 = vmatpush1.bf16.msra.mxu0 %v1311
    %1913 = vmatprep.subr.bf16.mxu0 %v1316
    %1914 = vmatpush1.bf16.msra.mxu0 %v1315
    %1915 = vmatprep.mubr.bf16.mxu0 %v76
    %1916 = vmatmul.mubr.bf16.gmra.mrb[0].mxu0 %v75
    %v1917 = vpop.f32.mrb[0].mxu0
    %v1918 = vadd.f32 %v1877, %v1917
    %v1919 = vpop.f32.mrb[0].mxu0
    %v1920 = vadd.f32 %v1879, %v1919
    %v1921 = vpop.f32.mrb[0].mxu0
    %v1922 = vpop.f32.mrb[0].mxu0
    %1923 = vdwg.mxu0
    %1924 = vmatprep.subr.bf16.mxu0 %v1320
    %1925 = vmatpush1.bf16.msra.mxu0 %v1319
    %1926 = vmatprep.subr.bf16.mxu0 %v1324
    %1927 = vmatpush1.bf16.msra.mxu0 %v1323
    %1928 = vmatprep.subr.bf16.mxu0 %v1328
    %1929 = vmatpush1.bf16.msra.mxu0 %v1327
    %1930 = vmatprep.subr.bf16.mxu0 %v1332
    %1931 = vmatpush1.bf16.msra.mxu0 %v1331
    %1932 = vmatprep.subr.bf16.mxu0 %v1336
    %1933 = vmatpush1.bf16.msra.mxu0 %v1335
    %1934 = vmatprep.subr.bf16.mxu0 %v1340
    %1935 = vmatpush1.bf16.msra.mxu0 %v1339
    %1936 = vmatprep.subr.bf16.mxu0 %v1344
    %1937 = vmatpush1.bf16.msra.mxu0 %v1343
    %1938 = vmatprep.subr.bf16.mxu0 %v1348
    %1939 = vmatpush1.bf16.msra.mxu0 %v1347
    %1940 = vmatprep.subr.bf16.mxu0 %v1352
    %1941 = vmatpush1.bf16.msra.mxu0 %v1351
    %1942 = vmatprep.subr.bf16.mxu0 %v1356
    %1943 = vmatpush1.bf16.msra.mxu0 %v1355
    %1944 = vmatprep.subr.bf16.mxu0 %v1360
    %1945 = vmatpush1.bf16.msra.mxu0 %v1359
    %1946 = vmatprep.subr.bf16.mxu0 %v1364
    %1947 = vmatpush1.bf16.msra.mxu0 %v1363
    %1948 = vmatprep.subr.bf16.mxu0 %v1368
    %1949 = vmatpush1.bf16.msra.mxu0 %v1367
    %1950 = vmatprep.subr.bf16.mxu0 %v1372
    %1951 = vmatpush1.bf16.msra.mxu0 %v1371
    %1952 = vmatprep.subr.bf16.mxu0 %v1376
    %1953 = vmatpush1.bf16.msra.mxu0 %v1375
    %1954 = vmatprep.subr.bf16.mxu0 %v1380
    %1955 = vmatpush1.bf16.msra.mxu0 %v1379
    %1956 = vmatprep.mubr.bf16.mxu0 %v78
    %1957 = vmatmul.mubr.bf16.gmra.mrb[0].mxu0 %v77
    %v1958 = vpop.f32.mrb[0].mxu0
    %v1959 = vadd.f32 %v1918, %v1958
    %v1960 = vpop.f32.mrb[0].mxu0
    %v1961 = vadd.f32 %v1920, %v1960
    %v1962 = vpop.f32.mrb[0].mxu0
    %v1963 = vpop.f32.mrb[0].mxu0
    %1964 = vdwg.mxu0
    %v1965 = vmax.f32 %v1795, 0.0
    %v1966 = vmax.f32 %v1797, 0.0
    %v1967 = vmax.f32 %v1959, 0.0
    %v1968 = vmax.f32 %v1961, 0.0
    %v1969 = vpack.c.bf16 %v1965, %v1965
    %v1970 = vpack.c.bf16 %v1966, %v1966
    %v1971 = vpack.c.bf16 %v1967, %v1967
    %v1972 = vpack.c.bf16 %v1968, %v1968
    %v1973 = vld [vmem:[%s2] sm:$0xff]
    %v1974 = vld [vmem:[%s2 + $0x8] sm:$0xff]
    %v1975 = vld [vmem:[%s2 + $0x10] sm:$0xff]
    %v1976 = vld [vmem:[%s2 + $0x18] sm:$0xff]
    %v1977 = vld [vmem:[%s2 + $0x20] sm:$0xff]
    %v1978 = vld [vmem:[%s2 + $0x28] sm:$0xff]
    %v1979 = vld [vmem:[%s2 + $0x30] sm:$0xff]
    %v1980 = vld [vmem:[%s2 + $0x38] sm:$0xff]
    %v1981 = vld [vmem:[%s2 + $0x40] sm:$0xff]
    %v1982 = vld [vmem:[%s2 + $0x48] sm:$0xff]
    %v1983 = vld [vmem:[%s2 + $0x50] sm:$0xff]
    %v1984 = vld [vmem:[%s2 + $0x58] sm:$0xff]
    %v1985 = vld [vmem:[%s2 + $0x60] sm:$0xff]
    %v1986 = vld [vmem:[%s2 + $0x68] sm:$0xff]
    %v1987 = vld [vmem:[%s2 + $0x70] sm:$0xff]
    %v1988 = vld [vmem:[%s2 + $0x78] sm:$0xff]
    %v1989 = vld [vmem:[%s2 + $0x80] sm:$0xff]
    %v1990 = vld [vmem:[%s2 + $0x88] sm:$0xff]
    %v1991 = vld [vmem:[%s2 + $0x90] sm:$0xff]
    %v1992 = vld [vmem:[%s2 + $0x98] sm:$0xff]
    %v1993 = vld [vmem:[%s2 + $0xa0] sm:$0xff]
    %v1994 = vld [vmem:[%s2 + $0xa8] sm:$0xff]
    %v1995 = vld [vmem:[%s2 + $0xb0] sm:$0xff]
    %v1996 = vld [vmem:[%s2 + $0xb8] sm:$0xff]
    %v1997 = vld [vmem:[%s2 + $0xc0] sm:$0xff]
    %v1998 = vld [vmem:[%s2 + $0xc8] sm:$0xff]
    %v1999 = vld [vmem:[%s2 + $0xd0] sm:$0xff]
    %v2000 = vld [vmem:[%s2 + $0xd8] sm:$0xff]
    %v2001 = vld [vmem:[%s2 + $0xe0] sm:$0xff]
    %v2002 = vld [vmem:[%s2 + $0xe8] sm:$0xff]
    %v2003 = vld [vmem:[%s2 + $0xf0] sm:$0xff]
    %v2004 = vld [vmem:[%s2 + $0xf8] sm:$0xff]
    %v2005 = vld [vmem:[%s2 + $0x100] sm:$0xff]
    %v2006 = vld [vmem:[%s2 + $0x108] sm:$0xff]
    %v2007 = vld [vmem:[%s2 + $0x110] sm:$0xff]
    %v2008 = vld [vmem:[%s2 + $0x118] sm:$0xff]
    %v2009 = vld [vmem:[%s2 + $0x120] sm:$0xff]
    %v2010 = vld [vmem:[%s2 + $0x128] sm:$0xff]
    %v2011 = vld [vmem:[%s2 + $0x130] sm:$0xff]
    %v2012 = vld [vmem:[%s2 + $0x138] sm:$0xff]
    %v2013 = vld [vmem:[%s2 + $0x140] sm:$0xff]
    %v2014 = vld [vmem:[%s2 + $0x148] sm:$0xff]
    %v2015 = vld [vmem:[%s2 + $0x150] sm:$0xff]
    %v2016 = vld [vmem:[%s2 + $0x158] sm:$0xff]
    %v2017 = vld [vmem:[%s2 + $0x160] sm:$0xff]
    %v2018 = vld [vmem:[%s2 + $0x168] sm:$0xff]
    %v2019 = vld [vmem:[%s2 + $0x170] sm:$0xff]
    %v2020 = vld [vmem:[%s2 + $0x178] sm:$0xff]
    %v2021 = vld [vmem:[%s2 + $0x180] sm:$0xff]
    %v2022 = vld [vmem:[%s2 + $0x188] sm:$0xff]
    %v2023 = vld [vmem:[%s2 + $0x190] sm:$0xff]
    %v2024 = vld [vmem:[%s2 + $0x198] sm:$0xff]
    %v2025 = vld [vmem:[%s2 + $0x1a0] sm:$0xff]
    %v2026 = vld [vmem:[%s2 + $0x1a8] sm:$0xff]
    %v2027 = vld [vmem:[%s2 + $0x1b0] sm:$0xff]
    %v2028 = vld [vmem:[%s2 + $0x1b8] sm:$0xff]
    %v2029 = vld [vmem:[%s2 + $0x1c0] sm:$0xff]
    %v2030 = vld [vmem:[%s2 + $0x1c8] sm:$0xff]
    %v2031 = vld [vmem:[%s2 + $0x1d0] sm:$0xff]
    %v2032 = vld [vmem:[%s2 + $0x1d8] sm:$0xff]
    %v2033 = vld [vmem:[%s2 + $0x1e0] sm:$0xff]
    %v2034 = vld [vmem:[%s2 + $0x1e8] sm:$0xff]
    %v2035 = vld [vmem:[%s2 + $0x1f0] sm:$0xff]
    %v2036 = vld [vmem:[%s2 + $0x1f8] sm:$0xff]
    %s2037 = scalar_lea.vmem %s5, 1
    %v2038 = vld [vmem:[%s2037] ss:$4 sm:$0x3]
    %v2040 = vlaneseq
    %v2041 = vshrl.u32 %v2040, 7
    %v2042 = vsub.s32 0, %v2041
    %v2043 = vrot.slane %v2038, %v2042
    %v2044 = vlaneseq
    %v2045 = vshrl.u32 %v2044, 7
    %v2046 = vsub.s32 1, %v2045
    %v2047 = vrot.slane %v2038, %v2046
    %v2114 = vunpack.c.l.b16 %v1973
    %v2115 = vunpack.c.h.b16 %v1973
    %v2116 = vunpack.c.l.b16 %v1974
    %v2117 = vunpack.c.h.b16 %v1974
    %v2118 = vunpack.c.l.b16 %v1975
    %v2119 = vunpack.c.h.b16 %v1975
    %v2120 = vunpack.c.l.b16 %v1976
    %v2121 = vunpack.c.h.b16 %v1976
    %v2122 = vunpack.c.l.b16 %v1977
    %v2123 = vunpack.c.h.b16 %v1977
    %v2124 = vunpack.c.l.b16 %v1978
    %v2125 = vunpack.c.h.b16 %v1978
    %v2126 = vunpack.c.l.b16 %v1979
    %v2127 = vunpack.c.h.b16 %v1979
    %v2128 = vunpack.c.l.b16 %v1980
    %v2129 = vunpack.c.h.b16 %v1980
    %v2130 = vunpack.c.l.b16 %v1981
    %v2131 = vunpack.c.h.b16 %v1981
    %v2132 = vunpack.c.l.b16 %v1982
    %v2133 = vunpack.c.h.b16 %v1982
    %v2134 = vunpack.c.l.b16 %v1983
    %v2135 = vunpack.c.h.b16 %v1983
    %v2136 = vunpack.c.l.b16 %v1984
    %v2137 = vunpack.c.h.b16 %v1984
    %v2138 = vunpack.c.l.b16 %v1985
    %v2139 = vunpack.c.h.b16 %v1985
    %v2140 = vunpack.c.l.b16 %v1986
    %v2141 = vunpack.c.h.b16 %v1986
    %v2142 = vunpack.c.l.b16 %v1987
    %v2143 = vunpack.c.h.b16 %v1987
    %v2144 = vunpack.c.l.b16 %v1988
    %v2145 = vunpack.c.h.b16 %v1988
    %v2146 = vunpack.c.l.b16 %v1989
    %v2147 = vunpack.c.h.b16 %v1989
    %v2148 = vunpack.c.l.b16 %v1990
    %v2149 = vunpack.c.h.b16 %v1990
    %v2150 = vunpack.c.l.b16 %v1991
    %v2151 = vunpack.c.h.b16 %v1991
    %v2152 = vunpack.c.l.b16 %v1992
    %v2153 = vunpack.c.h.b16 %v1992
    %v2154 = vunpack.c.l.b16 %v1993
    %v2155 = vunpack.c.h.b16 %v1993
    %v2156 = vunpack.c.l.b16 %v1994
    %v2157 = vunpack.c.h.b16 %v1994
    %v2158 = vunpack.c.l.b16 %v1995
    %v2159 = vunpack.c.h.b16 %v1995
    %v2160 = vunpack.c.l.b16 %v1996
    %v2161 = vunpack.c.h.b16 %v1996
    %v2162 = vunpack.c.l.b16 %v1997
    %v2163 = vunpack.c.h.b16 %v1997
    %v2164 = vunpack.c.l.b16 %v1998
    %v2165 = vunpack.c.h.b16 %v1998
    %v2166 = vunpack.c.l.b16 %v1999
    %v2167 = vunpack.c.h.b16 %v1999
    %v2168 = vunpack.c.l.b16 %v2000
    %v2169 = vunpack.c.h.b16 %v2000
    %v2170 = vunpack.c.l.b16 %v2001
    %v2171 = vunpack.c.h.b16 %v2001
    %v2172 = vunpack.c.l.b16 %v2002
    %v2173 = vunpack.c.h.b16 %v2002
    %v2174 = vunpack.c.l.b16 %v2003
    %v2175 = vunpack.c.h.b16 %v2003
    %v2176 = vunpack.c.l.b16 %v2004
    %v2177 = vunpack.c.h.b16 %v2004
    %v2178 = vunpack.c.l.b16 %v2005
    %v2179 = vunpack.c.h.b16 %v2005
    %v2180 = vunpack.c.l.b16 %v2006
    %v2181 = vunpack.c.h.b16 %v2006
    %v2182 = vunpack.c.l.b16 %v2007
    %v2183 = vunpack.c.h.b16 %v2007
    %v2184 = vunpack.c.l.b16 %v2008
    %v2185 = vunpack.c.h.b16 %v2008
    %v2186 = vunpack.c.l.b16 %v2009
    %v2187 = vunpack.c.h.b16 %v2009
    %v2188 = vunpack.c.l.b16 %v2010
    %v2189 = vunpack.c.h.b16 %v2010
    %v2190 = vunpack.c.l.b16 %v2011
    %v2191 = vunpack.c.h.b16 %v2011
    %v2192 = vunpack.c.l.b16 %v2012
    %v2193 = vunpack.c.h.b16 %v2012
    %v2194 = vunpack.c.l.b16 %v2013
    %v2195 = vunpack.c.h.b16 %v2013
    %v2196 = vunpack.c.l.b16 %v2014
    %v2197 = vunpack.c.h.b16 %v2014
    %v2198 = vunpack.c.l.b16 %v2015
    %v2199 = vunpack.c.h.b16 %v2015
    %v2200 = vunpack.c.l.b16 %v2016
    %v2201 = vunpack.c.h.b16 %v2016
    %v2202 = vunpack.c.l.b16 %v2017
    %v2203 = vunpack.c.h.b16 %v2017
    %v2204 = vunpack.c.l.b16 %v2018
    %v2205 = vunpack.c.h.b16 %v2018
    %v2206 = vunpack.c.l.b16 %v2019
    %v2207 = vunpack.c.h.b16 %v2019
    %v2208 = vunpack.c.l.b16 %v2020
    %v2209 = vunpack.c.h.b16 %v2020
    %v2210 = vunpack.c.l.b16 %v2021
    %v2211 = vunpack.c.h.b16 %v2021
    %v2212 = vunpack.c.l.b16 %v2022
    %v2213 = vunpack.c.h.b16 %v2022
    %v2214 = vunpack.c.l.b16 %v2023
    %v2215 = vunpack.c.h.b16 %v2023
    %v2216 = vunpack.c.l.b16 %v2024
    %v2217 = vunpack.c.h.b16 %v2024
    %v2218 = vunpack.c.l.b16 %v2025
    %v2219 = vunpack.c.h.b16 %v2025
    %v2220 = vunpack.c.l.b16 %v2026
    %v2221 = vunpack.c.h.b16 %v2026
    %v2222 = vunpack.c.l.b16 %v2027
    %v2223 = vunpack.c.h.b16 %v2027
    %v2224 = vunpack.c.l.b16 %v2028
    %v2225 = vunpack.c.h.b16 %v2028
    %v2226 = vunpack.c.l.b16 %v2029
    %v2227 = vunpack.c.h.b16 %v2029
    %v2228 = vunpack.c.l.b16 %v2030
    %v2229 = vunpack.c.h.b16 %v2030
    %v2230 = vunpack.c.l.b16 %v2031
    %v2231 = vunpack.c.h.b16 %v2031
    %v2232 = vunpack.c.l.b16 %v2032
    %v2233 = vunpack.c.h.b16 %v2032
    %v2234 = vunpack.c.l.b16 %v2033
    %v2235 = vunpack.c.h.b16 %v2033
    %v2236 = vunpack.c.l.b16 %v2034
    %v2237 = vunpack.c.h.b16 %v2034
    %v2238 = vunpack.c.l.b16 %v2035
    %v2239 = vunpack.c.h.b16 %v2035
    %v2240 = vunpack.c.l.b16 %v2036
    %v2241 = vunpack.c.h.b16 %v2036
    %v2242 = vpack.c.b16 %v2116, %v2114
    %v2243 = vpack.c.b16 %v2117, %v2115
    %v2244 = vpack.c.b16 %v2120, %v2118
    %v2245 = vpack.c.b16 %v2121, %v2119
    %v2246 = vpack.c.b16 %v2124, %v2122
    %v2247 = vpack.c.b16 %v2125, %v2123
    %v2248 = vpack.c.b16 %v2128, %v2126
    %v2249 = vpack.c.b16 %v2129, %v2127
    %v2250 = vpack.c.b16 %v2132, %v2130
    %v2251 = vpack.c.b16 %v2133, %v2131
    %v2252 = vpack.c.b16 %v2136, %v2134
    %v2253 = vpack.c.b16 %v2137, %v2135
    %v2254 = vpack.c.b16 %v2140, %v2138
    %v2255 = vpack.c.b16 %v2141, %v2139
    %v2256 = vpack.c.b16 %v2144, %v2142
    %v2257 = vpack.c.b16 %v2145, %v2143
    %v2258 = vpack.c.b16 %v2148, %v2146
    %v2259 = vpack.c.b16 %v2149, %v2147
    %v2260 = vpack.c.b16 %v2152, %v2150
    %v2261 = vpack.c.b16 %v2153, %v2151
    %v2262 = vpack.c.b16 %v2156, %v2154
    %v2263 = vpack.c.b16 %v2157, %v2155
    %v2264 = vpack.c.b16 %v2160, %v2158
    %v2265 = vpack.c.b16 %v2161, %v2159
    %v2266 = vpack.c.b16 %v2164, %v2162
    %v2267 = vpack.c.b16 %v2165, %v2163
    %v2268 = vpack.c.b16 %v2168, %v2166
    %v2269 = vpack.c.b16 %v2169, %v2167
    %v2270 = vpack.c.b16 %v2172, %v2170
    %v2271 = vpack.c.b16 %v2173, %v2171
    %v2272 = vpack.c.b16 %v2176, %v2174
    %v2273 = vpack.c.b16 %v2177, %v2175
    %v2274 = vpack.c.b16 %v2180, %v2178
    %v2275 = vpack.c.b16 %v2181, %v2179
    %v2276 = vpack.c.b16 %v2184, %v2182
    %v2277 = vpack.c.b16 %v2185, %v2183
    %v2278 = vpack.c.b16 %v2188, %v2186
    %v2279 = vpack.c.b16 %v2189, %v2187
    %v2280 = vpack.c.b16 %v2192, %v2190
    %v2281 = vpack.c.b16 %v2193, %v2191
    %v2282 = vpack.c.b16 %v2196, %v2194
    %v2283 = vpack.c.b16 %v2197, %v2195
    %v2284 = vpack.c.b16 %v2200, %v2198
    %v2285 = vpack.c.b16 %v2201, %v2199
    %v2286 = vpack.c.b16 %v2204, %v2202
    %v2287 = vpack.c.b16 %v2205, %v2203
    %v2288 = vpack.c.b16 %v2208, %v2206
    %v2289 = vpack.c.b16 %v2209, %v2207
    %v2290 = vpack.c.b16 %v2212, %v2210
    %v2291 = vpack.c.b16 %v2213, %v2211
    %v2292 = vpack.c.b16 %v2216, %v2214
    %v2293 = vpack.c.b16 %v2217, %v2215
    %v2294 = vpack.c.b16 %v2220, %v2218
    %v2295 = vpack.c.b16 %v2221, %v2219
    %v2296 = vpack.c.b16 %v2224, %v2222
    %v2297 = vpack.c.b16 %v2225, %v2223
    %v2298 = vpack.c.b16 %v2228, %v2226
    %v2299 = vpack.c.b16 %v2229, %v2227
    %v2300 = vpack.c.b16 %v2232, %v2230
    %v2301 = vpack.c.b16 %v2233, %v2231
    %v2302 = vpack.c.b16 %v2236, %v2234
    %v2303 = vpack.c.b16 %v2237, %v2235
    %v2304 = vpack.c.b16 %v2240, %v2238
    %v2305 = vpack.c.b16 %v2241, %v2239
    %2370 = vmatprep.subr.bf16.mxu0 %v2243
    %2371 = vmatpush1.bf16.msra.mxu0 %v2242
    %2372 = vmatprep.subr.bf16.mxu0 %v2245
    %2373 = vmatpush1.bf16.msra.mxu0 %v2244
    %2374 = vmatprep.subr.bf16.mxu0 %v2247
    %2375 = vmatpush1.bf16.msra.mxu0 %v2246
    %2376 = vmatprep.subr.bf16.mxu0 %v2249
    %2377 = vmatpush1.bf16.msra.mxu0 %v2248
    %2378 = vmatprep.subr.bf16.mxu0 %v2251
    %2379 = vmatpush1.bf16.msra.mxu0 %v2250
    %2380 = vmatprep.subr.bf16.mxu0 %v2253
    %2381 = vmatpush1.bf16.msra.mxu0 %v2252
    %2382 = vmatprep.subr.bf16.mxu0 %v2255
    %2383 = vmatpush1.bf16.msra.mxu0 %v2254
    %2384 = vmatprep.subr.bf16.mxu0 %v2257
    %2385 = vmatpush1.bf16.msra.mxu0 %v2256
    %2386 = vmatprep.subr.bf16.mxu0 %v2259
    %2387 = vmatpush1.bf16.msra.mxu0 %v2258
    %2388 = vmatprep.subr.bf16.mxu0 %v2261
    %2389 = vmatpush1.bf16.msra.mxu0 %v2260
    %2390 = vmatprep.subr.bf16.mxu0 %v2263
    %2391 = vmatpush1.bf16.msra.mxu0 %v2262
    %2392 = vmatprep.subr.bf16.mxu0 %v2265
    %2393 = vmatpush1.bf16.msra.mxu0 %v2264
    %2394 = vmatprep.subr.bf16.mxu0 %v2267
    %2395 = vmatpush1.bf16.msra.mxu0 %v2266
    %2396 = vmatprep.subr.bf16.mxu0 %v2269
    %2397 = vmatpush1.bf16.msra.mxu0 %v2268
    %2398 = vmatprep.subr.bf16.mxu0 %v2271
    %2399 = vmatpush1.bf16.msra.mxu0 %v2270
    %2400 = vmatprep.subr.bf16.mxu0 %v2273
    %2401 = vmatpush1.bf16.msra.mxu0 %v2272
    %2402 = vmatprep.mubr.bf16.mxu0 %v1970
    %2403 = vmatmul.mubr.bf16.gmra.mrb[0].mxu0 %v1969
    %v2404 = vpop.f32.mrb[0].mxu0
    %v2405 = vadd.f32 %v2043, %v2404
    %v2406 = vpop.f32.mrb[0].mxu0
    %v2407 = vadd.f32 %v2047, %v2406
    %v2408 = vpop.f32.mrb[0].mxu0
    %v2409 = vpop.f32.mrb[0].mxu0
    %2410 = vdwg.mxu0
    %2411 = vmatprep.subr.bf16.mxu0 %v2275
    %2412 = vmatpush1.bf16.msra.mxu0 %v2274
    %2413 = vmatprep.subr.bf16.mxu0 %v2277
    %2414 = vmatpush1.bf16.msra.mxu0 %v2276
    %2415 = vmatprep.subr.bf16.mxu0 %v2279
    %2416 = vmatpush1.bf16.msra.mxu0 %v2278
    %2417 = vmatprep.subr.bf16.mxu0 %v2281
    %2418 = vmatpush1.bf16.msra.mxu0 %v2280
    %2419 = vmatprep.subr.bf16.mxu0 %v2283
    %2420 = vmatpush1.bf16.msra.mxu0 %v2282
    %2421 = vmatprep.subr.bf16.mxu0 %v2285
    %2422 = vmatpush1.bf16.msra.mxu0 %v2284
    %2423 = vmatprep.subr.bf16.mxu0 %v2287
    %2424 = vmatpush1.bf16.msra.mxu0 %v2286
    %2425 = vmatprep.subr.bf16.mxu0 %v2289
    %2426 = vmatpush1.bf16.msra.mxu0 %v2288
    %2427 = vmatprep.subr.bf16.mxu0 %v2291
    %2428 = vmatpush1.bf16.msra.mxu0 %v2290
    %2429 = vmatprep.subr.bf16.mxu0 %v2293
    %2430 = vmatpush1.bf16.msra.mxu0 %v2292
    %2431 = vmatprep.subr.bf16.mxu0 %v2295
    %2432 = vmatpush1.bf16.msra.mxu0 %v2294
    %2433 = vmatprep.subr.bf16.mxu0 %v2297
    %2434 = vmatpush1.bf16.msra.mxu0 %v2296
    %2435 = vmatprep.subr.bf16.mxu0 %v2299
    %2436 = vmatpush1.bf16.msra.mxu0 %v2298
    %2437 = vmatprep.subr.bf16.mxu0 %v2301
    %2438 = vmatpush1.bf16.msra.mxu0 %v2300
    %2439 = vmatprep.subr.bf16.mxu0 %v2303
    %2440 = vmatpush1.bf16.msra.mxu0 %v2302
    %2441 = vmatprep.subr.bf16.mxu0 %v2305
    %2442 = vmatpush1.bf16.msra.mxu0 %v2304
    %2443 = vmatprep.mubr.bf16.mxu0 %v1972
    %2444 = vmatmul.mubr.bf16.gmra.mrb[0].mxu0 %v1971
    %v2445 = vpop.f32.mrb[0].mxu0
    %v2446 = vadd.f32 %v2405, %v2445
    %v2447 = vpop.f32.mrb[0].mxu0
    %v2448 = vadd.f32 %v2407, %v2447
    %v2449 = vpop.f32.mrb[0].mxu0
    %v2450 = vpop.f32.mrb[0].mxu0
    %2451 = vdwg.mxu0
    %v2452 = vmax.f32 %v2446, 0.0
    %v2453 = vmax.f32 %v2448, 0.0
    %v2454 = vpack.c.bf16 %v2452, %v2452
    %v2455 = vpack.c.bf16 %v2453, %v2453
    %v2456 = vld [vmem:[%s3] sm:$0xf]
    %v2457 = vld [vmem:[%s3 + $0x4] sm:$0xf]
    %v2458 = vld [vmem:[%s3 + $0x8] sm:$0xf]
    %v2459 = vld [vmem:[%s3 + $0xc] sm:$0xf]
    %v2460 = vld [vmem:[%s3 + $0x10] sm:$0xf]
    %v2461 = vld [vmem:[%s3 + $0x14] sm:$0xf]
    %v2462 = vld [vmem:[%s3 + $0x18] sm:$0xf]
    %v2463 = vld [vmem:[%s3 + $0x1c] sm:$0xf]
    %v2464 = vld [vmem:[%s3 + $0x20] sm:$0xf]
    %v2465 = vld [vmem:[%s3 + $0x24] sm:$0xf]
    %v2466 = vld [vmem:[%s3 + $0x28] sm:$0xf]
    %v2467 = vld [vmem:[%s3 + $0x2c] sm:$0xf]
    %v2468 = vld [vmem:[%s3 + $0x30] sm:$0xf]
    %v2469 = vld [vmem:[%s3 + $0x34] sm:$0xf]
    %v2470 = vld [vmem:[%s3 + $0x38] sm:$0xf]
    %v2471 = vld [vmem:[%s3 + $0x3c] sm:$0xf]
    %v2472 = vld [vmem:[%s3 + $0x40] sm:$0xf]
    %v2473 = vld [vmem:[%s3 + $0x44] sm:$0xf]
    %v2474 = vld [vmem:[%s3 + $0x48] sm:$0xf]
    %v2475 = vld [vmem:[%s3 + $0x4c] sm:$0xf]
    %v2476 = vld [vmem:[%s3 + $0x50] sm:$0xf]
    %v2477 = vld [vmem:[%s3 + $0x54] sm:$0xf]
    %v2478 = vld [vmem:[%s3 + $0x58] sm:$0xf]
    %v2479 = vld [vmem:[%s3 + $0x5c] sm:$0xf]
    %v2480 = vld [vmem:[%s3 + $0x60] sm:$0xf]
    %v2481 = vld [vmem:[%s3 + $0x64] sm:$0xf]
    %v2482 = vld [vmem:[%s3 + $0x68] sm:$0xf]
    %v2483 = vld [vmem:[%s3 + $0x6c] sm:$0xf]
    %v2484 = vld [vmem:[%s3 + $0x70] sm:$0xf]
    %v2485 = vld [vmem:[%s3 + $0x74] sm:$0xf]
    %v2486 = vld [vmem:[%s3 + $0x78] sm:$0xf]
    %v2487 = vld [vmem:[%s3 + $0x7c] sm:$0xf]
    %v2488 = vld [vmem:[%s5 + $0x2] sm:$0x1]
    %v2489 = vlaneseq
    %v2490 = vshrl.u32 %v2489, 7
    %v2491 = vsub.s32 0, %v2490
    %v2492 = vrot.slane %v2488, %v2491
    %v2525 = vunpack.c.l.b16 %v2456
    %v2526 = vunpack.c.l.b16 %v2457
    %v2527 = vunpack.c.l.b16 %v2458
    %v2528 = vunpack.c.l.b16 %v2459
    %v2529 = vunpack.c.l.b16 %v2460
    %v2530 = vunpack.c.l.b16 %v2461
    %v2531 = vunpack.c.l.b16 %v2462
    %v2532 = vunpack.c.l.b16 %v2463
    %v2533 = vunpack.c.l.b16 %v2464
    %v2534 = vunpack.c.l.b16 %v2465
    %v2535 = vunpack.c.l.b16 %v2466
    %v2536 = vunpack.c.l.b16 %v2467
    %v2537 = vunpack.c.l.b16 %v2468
    %v2538 = vunpack.c.l.b16 %v2469
    %v2539 = vunpack.c.l.b16 %v2470
    %v2540 = vunpack.c.l.b16 %v2471
    %v2541 = vunpack.c.l.b16 %v2472
    %v2542 = vunpack.c.l.b16 %v2473
    %v2543 = vunpack.c.l.b16 %v2474
    %v2544 = vunpack.c.l.b16 %v2475
    %v2545 = vunpack.c.l.b16 %v2476
    %v2546 = vunpack.c.l.b16 %v2477
    %v2547 = vunpack.c.l.b16 %v2478
    %v2548 = vunpack.c.l.b16 %v2479
    %v2549 = vunpack.c.l.b16 %v2480
    %v2550 = vunpack.c.l.b16 %v2481
    %v2551 = vunpack.c.l.b16 %v2482
    %v2552 = vunpack.c.l.b16 %v2483
    %v2553 = vunpack.c.l.b16 %v2484
    %v2554 = vunpack.c.l.b16 %v2485
    %v2555 = vunpack.c.l.b16 %v2486
    %v2556 = vunpack.c.l.b16 %v2487
    %v2557 = vpack.c.b16 %v2526, %v2525
    %v2558 = vpack.c.b16 %v2528, %v2527
    %v2559 = vpack.c.b16 %v2530, %v2529
    %v2560 = vpack.c.b16 %v2532, %v2531
    %v2561 = vpack.c.b16 %v2534, %v2533
    %v2562 = vpack.c.b16 %v2536, %v2535
    %v2563 = vpack.c.b16 %v2538, %v2537
    %v2564 = vpack.c.b16 %v2540, %v2539
    %v2565 = vpack.c.b16 %v2542, %v2541
    %v2566 = vpack.c.b16 %v2544, %v2543
    %v2567 = vpack.c.b16 %v2546, %v2545
    %v2568 = vpack.c.b16 %v2548, %v2547
    %v2569 = vpack.c.b16 %v2550, %v2549
    %v2570 = vpack.c.b16 %v2552, %v2551
    %v2571 = vpack.c.b16 %v2554, %v2553
    %v2572 = vpack.c.b16 %v2556, %v2555
    %2589 = vmatprep.subr.bf16.mxu0 0
    %2590 = vmatpush1.bf16.msra.mxu0 %v2557
    %2591 = vmatprep.subr.bf16.mxu0 0
    %2592 = vmatpush1.bf16.msra.mxu0 %v2558
    %2593 = vmatprep.subr.bf16.mxu0 0
    %2594 = vmatpush1.bf16.msra.mxu0 %v2559
    %2595 = vmatprep.subr.bf16.mxu0 0
    %2596 = vmatpush1.bf16.msra.mxu0 %v2560
    %2597 = vmatprep.subr.bf16.mxu0 0
    %2598 = vmatpush1.bf16.msra.mxu0 %v2561
    %2599 = vmatprep.subr.bf16.mxu0 0
    %2600 = vmatpush1.bf16.msra.mxu0 %v2562
    %2601 = vmatprep.subr.bf16.mxu0 0
    %2602 = vmatpush1.bf16.msra.mxu0 %v2563
    %2603 = vmatprep.subr.bf16.mxu0 0
    %2604 = vmatpush1.bf16.msra.mxu0 %v2564
    %2605 = vmatprep.subr.bf16.mxu0 0
    %2606 = vmatpush1.bf16.msra.mxu0 %v2565
    %2607 = vmatprep.subr.bf16.mxu0 0
    %2608 = vmatpush1.bf16.msra.mxu0 %v2566
    %2609 = vmatprep.subr.bf16.mxu0 0
    %2610 = vmatpush1.bf16.msra.mxu0 %v2567
    %2611 = vmatprep.subr.bf16.mxu0 0
    %2612 = vmatpush1.bf16.msra.mxu0 %v2568
    %2613 = vmatprep.subr.bf16.mxu0 0
    %2614 = vmatpush1.bf16.msra.mxu0 %v2569
    %2615 = vmatprep.subr.bf16.mxu0 0
    %2616 = vmatpush1.bf16.msra.mxu0 %v2570
    %2617 = vmatprep.subr.bf16.mxu0 0
    %2618 = vmatpush1.bf16.msra.mxu0 %v2571
    %2619 = vmatprep.subr.bf16.mxu0 0
    %2620 = vmatpush1.bf16.msra.mxu0 %v2572
    %2621 = vmatprep.mubr.bf16.mxu0 %v2455
    %2622 = vmatmul.mubr.bf16.gmra.mrb[0].mxu0 %v2454
    %v2623 = vpop.f32.mrb[0].mxu0
    %v2624 = vadd.f32 %v2492, %v2623
    %v2625 = vpop.f32.mrb[0].mxu0
    %v2626 = vpop.f32.mrb[0].mxu0
    %v2627 = vpop.f32.mrb[0].mxu0
    %2628 = vdwg.mxu0
    %v2629 = vmax.f32 %v2624, 0.0
    %v2630 = vpack.c.bf16 %v2629, %v2629
    %v2631 = vld [vmem:[%s4] sm:$0xf]
    %v2632 = vld [vmem:[%s4 + $0x4] sm:$0xf]
    %v2633 = vld [vmem:[%s4 + $0x8] sm:$0xf]
    %v2634 = vld [vmem:[%s4 + $0xc] sm:$0xf]
    %v2635 = vld [vmem:[%s4 + $0x10] sm:$0xf]
    %v2636 = vld [vmem:[%s4 + $0x14] sm:$0xf]
    %v2637 = vld [vmem:[%s4 + $0x18] sm:$0xf]
    %v2638 = vld [vmem:[%s4 + $0x1c] sm:$0xf]
    %v2639 = vld [vmem:[%s4 + $0x20] sm:$0xf]
    %v2640 = vld [vmem:[%s4 + $0x24] sm:$0xf]
    %v2641 = vld [vmem:[%s4 + $0x28] sm:$0xf]
    %v2642 = vld [vmem:[%s4 + $0x2c] sm:$0xf]
    %v2643 = vld [vmem:[%s4 + $0x30] sm:$0xf]
    %v2644 = vld [vmem:[%s4 + $0x34] sm:$0xf]
    %v2645 = vld [vmem:[%s4 + $0x38] sm:$0xf]
    %v2646 = vld [vmem:[%s4 + $0x3c] sm:$0xf]
    %v2647 = vld [vmem:[%s5 + $0x3] sm:$0x1]
    %v2648 = vlaneseq
    %v2649 = vshrl.u32 %v2648, 7
    %v2650 = vsub.s32 0, %v2649
    %v2651 = vrot.slane %v2647, %v2650
    %v2668 = vunpack.c.l.b16 %v2631
    %v2669 = vunpack.c.l.b16 %v2632
    %v2670 = vunpack.c.l.b16 %v2633
    %v2671 = vunpack.c.l.b16 %v2634
    %v2672 = vunpack.c.l.b16 %v2635
    %v2673 = vunpack.c.l.b16 %v2636
    %v2674 = vunpack.c.l.b16 %v2637
    %v2675 = vunpack.c.l.b16 %v2638
    %v2676 = vunpack.c.l.b16 %v2639
    %v2677 = vunpack.c.l.b16 %v2640
    %v2678 = vunpack.c.l.b16 %v2641
    %v2679 = vunpack.c.l.b16 %v2642
    %v2680 = vunpack.c.l.b16 %v2643
    %v2681 = vunpack.c.l.b16 %v2644
    %v2682 = vunpack.c.l.b16 %v2645
    %v2683 = vunpack.c.l.b16 %v2646
    %v2684 = vpack.c.b16 %v2669, %v2668
    %v2685 = vpack.c.b16 %v2671, %v2670
    %v2686 = vpack.c.b16 %v2673, %v2672
    %v2687 = vpack.c.b16 %v2675, %v2674
    %v2688 = vpack.c.b16 %v2677, %v2676
    %v2689 = vpack.c.b16 %v2679, %v2678
    %v2690 = vpack.c.b16 %v2681, %v2680
    %v2691 = vpack.c.b16 %v2683, %v2682
    %2700 = vmatprep.subr.bf16.mxu0 0
    %2701 = vmatpush1.bf16.msra.mxu0 %v2684
    %2702 = vmatprep.subr.bf16.mxu0 0
    %2703 = vmatpush1.bf16.msra.mxu0 %v2685
    %2704 = vmatprep.subr.bf16.mxu0 0
    %2705 = vmatpush1.bf16.msra.mxu0 %v2686
    %2706 = vmatprep.subr.bf16.mxu0 0
    %2707 = vmatpush1.bf16.msra.mxu0 %v2687
    %2708 = vmatprep.subr.bf16.mxu0 0
    %2709 = vmatpush1.bf16.msra.mxu0 %v2688
    %2710 = vmatprep.subr.bf16.mxu0 0
    %2711 = vmatpush1.bf16.msra.mxu0 %v2689
    %2712 = vmatprep.subr.bf16.mxu0 0
    %2713 = vmatpush1.bf16.msra.mxu0 %v2690
    %2714 = vmatprep.subr.bf16.mxu0 0
    %2715 = vmatpush1.bf16.msra.mxu0 %v2691
    %2716 = vmatprep.subr.bf16.mxu0 0
    %2717 = vmatpush1.bf16.msra.mxu0 0
    %2718 = vmatprep.subr.bf16.mxu0 0
    %2719 = vmatpush1.bf16.msra.mxu0 0
    %2720 = vmatprep.subr.bf16.mxu0 0
    %2721 = vmatpush1.bf16.msra.mxu0 0
    %2722 = vmatprep.subr.bf16.mxu0 0
    %2723 = vmatpush1.bf16.msra.mxu0 0
    %2724 = vmatprep.subr.bf16.mxu0 0
    %2725 = vmatpush1.bf16.msra.mxu0 0
    %2726 = vmatprep.subr.bf16.mxu0 0
    %2727 = vmatpush1.bf16.msra.mxu0 0
    %2728 = vmatprep.subr.bf16.mxu0 0
    %2729 = vmatpush1.bf16.msra.mxu0 0
    %2730 = vmatprep.subr.bf16.mxu0 0
    %2731 = vmatpush1.bf16.msra.mxu0 0
    %2732 = vmatprep.mubr.bf16.mxu0 0
    %2733 = vmatmul.mubr.bf16.gmra.mrb[0].mxu0 %v2630
    %v2734 = vpop.f32.mrb[0].mxu0
    %v2735 = vadd.f32 %v2651, %v2734
    %v2736 = vpop.f32.mrb[0].mxu0
    %v2737 = vpop.f32.mrb[0].mxu0
    %v2738 = vpop.f32.mrb[0].mxu0
    %2739 = vdwg.mxu0
    %vm2740 = vcmask 123904
    %2741 = vst.msk [vmem:[#allocation2] sm:$0x3] %vm2740, %v2735
    // Predicated region
    $region26: #{forward.1} parent=1 // pred_check
      _
    $region27: #{forward.1} parent=1 // pred_check_branch
      %2743 = sbr.rel (0) target = $region29
    $region28: #{forward.1} parent=1 // pred_region
      %s2745 = ssub.s32 32, 32
      %2746 = vsyncadd [#allocation3], %s2745
      %s2748 = sshll.u32 [#allocation2], 4
      %s2749 = int_to_ptr.vmem [resolvable:$true] %s2748
      %2751 = dma.vmem_to_hbm [thread:$0]  %s2749, 32, %s6, [#allocation3]
    $region29: #{forward.1} parent=1 // pred_fallthru
      _
    // Predicated region
    $region30: #{forward.1} parent=1 // pred_check
      _
    $region31: #{forward.1} parent=1 // pred_check_branch
      %2753 = sbr.rel (0) target = $region33
    $region32: #{forward.1} parent=1 // pred_region
      %2754 = dma.done [#allocation3], 32
    $region33: #{forward.1} parent=1 // pred_fallthru
      _
    %2755 = vsyncpa [#allocation3], 1

</llo_original>
